<compile_context>
chip_gen: v6e
topology: v6e:2x2x1
jax: 0.10.0
libtpu: 0.0.40
codegen_flags: <defaults>
</compile_context>

<pallas_src>
import functools
import math

import jax
import jax.numpy as jnp
from jax import lax
from jax.experimental import pallas as pl
from jax.experimental.pallas import tpu as pltpu

NEG_SLOPE = 0.01   # nn.LeakyReLU default
IN_EPS = 1e-5      # nn.InstanceNorm2d default


def _leaky(x):
    return jnp.where(x > 0, x, NEG_SLOPE * x)


def _msunet_up_kernel(xp_ref, wt_ref, bt_ref, wc_ref, bc_ref, m1_ref, m2_ref,
                      out_ref, pad_ref, *, H, W, Wp, fuse_parities,
                      accumulate_taps):
    # Per grid step (one batch sample), with Sp=(H+2)*Wp, Lout=H*Wp:
    #   xp_ref : (1, Cin, Sp)      bf16  zero-padded input, flat spatial on lanes
    #   wt_ref : (4*Cout, Cin)     bf16  fused ConvT weights, row=(2a+b)*Cout+co
    #   bt_ref : (4*Cout, 1)       f32   ConvT bias, tiled per parity plane
    #   wc_ref : (Cout, 9*Cout)    bf16  fused 3x3 weights, col=(3dy+dx)*Cout+ci
    #   bc_ref : (Cout, 1)         f32
    #   m1_ref : (1, Sp)           f32   1 on the interior of the (H+2,Wp) grid
    #   m2_ref : (1, 4*Lout)       f32   1 on valid columns of the (H,Wp) grid (x4)
    #   out_ref: (1, Cout, 4*Lout) bf16  parity-separated, lane-dense output
    #   pad_ref: (4*Cout, Sp+2)    bf16  scratch: normalized up-conv tap planes
    Sp = (H + 2) * Wp
    Lout = H * Wp
    Cout = out_ref.shape[1]
    cnt = float(4 * H * W)            # real elements per channel (= Ho*Wo)
    ring_cnt = float(Sp - H * W)      # zero-padded positions per tap plane

    # ---------------- stage 1: ConvTranspose2d(k=2,s=2) as ONE matmul ----------
    # y[(2a+b)*Cout+co, s] = sum_ci wt[ci,co,a,b] * x_pad[ci, s]   (kept flat)
    y = jnp.dot(wt_ref[...], xp_ref[0], preferred_element_type=jnp.float32)
    yl = _leaky(y + bt_ref[...])                                  # (4C, Sp) f32

    # InstanceNorm stats with analytic ring correction: at every padded position
    # the pre-activation is exactly the bias, so the ring contributes
    # ring_cnt * leaky(bias) to the raw sums.  No full-size mask multiply.
    ring = _leaky(bt_ref[...])                                    # (4C, 1)
    s1 = jnp.sum(yl, axis=1, keepdims=True) - ring_cnt * ring
    s2 = jnp.sum(yl * yl, axis=1, keepdims=True) - ring_cnt * (ring * ring)
    # combine the 4 parity planes per channel on tiny (Cout,1) vectors
    s1c = s1[0:Cout] + s1[Cout:2 * Cout] + s1[2 * Cout:3 * Cout] + s1[3 * Cout:4 * Cout]
    s2c = s2[0:Cout] + s2[Cout:2 * Cout] + s2[2 * Cout:3 * Cout] + s2[3 * Cout:4 * Cout]
    mean1 = s1c / cnt
    var1 = jnp.maximum(s2c / cnt - mean1 * mean1, 0.0)
    inv1 = lax.rsqrt(var1 + IN_EPS)
    mean1r = jnp.concatenate([mean1] * 4, axis=0)                 # (4C, 1)
    inv1r = jnp.concatenate([inv1] * 4, axis=0)

    # m1 restores exact zeros on the ring -- this IS the 3x3 conv zero padding.
    u = (yl - mean1r) * inv1r * m1_ref[...]
    pad_ref[:, :Sp] = u.astype(pad_ref.dtype)                     # one dense store
    pad_ref[:, Sp:] = jnp.zeros((4 * Cout, pad_ref.shape[1] - Sp), pad_ref.dtype)

    # ---------------- stage 2: Conv2d(k=3, pad=1) on the virtual interleave ----
    # Output pixel (2i+alpha, 2j+beta) reads the 4 tap planes at pure flat-index
    # shifts of the padded (H+2, Wp) grid.
    def tap(p, t):
        alpha, beta = p // 2, p % 2
        dy, dx = t // 3, t % 3
        va, vb = alpha + dy - 1, beta + dx - 1
        a, di = va % 2, va // 2           # source row-parity / row shift
        b, dj = vb % 2, vb // 2           # source col-parity / col shift
        plane = 2 * a + b
        off = (1 + di) * Wp + (1 + dj)
        return pad_ref[plane * Cout:(plane + 1) * Cout, off:off + Lout]

    if fuse_parities:
        # All 4 parity planes batched on the lane axis: ONE long-N matmul.
        patches = jnp.concatenate(
            [jnp.concatenate([tap(p, t) for p in range(4)], axis=1)
             for t in range(9)], axis=0)                          # (9C, 4*Lout)
        zl = _leaky(jnp.dot(wc_ref[...], patches,
                            preferred_element_type=jnp.float32) + bc_ref[...])
        zm = zl * m2_ref[...]
        mean2 = jnp.sum(zm, axis=1, keepdims=True) / cnt
        var2 = jnp.maximum(jnp.sum(zm * zl, axis=1, keepdims=True) / cnt
                           - mean2 * mean2, 0.0)
        inv2 = lax.rsqrt(var2 + IN_EPS)
        out_ref[0] = ((zl - mean2) * inv2).astype(out_ref.dtype)  # dense store
    else:
        m2 = m2_ref[:, :Lout]
        zsum = jnp.zeros((Cout, 1), jnp.float32)
        zsq = jnp.zeros((Cout, 1), jnp.float32)
        z_list = []
        for p in range(4):
            if accumulate_taps:
                # Cout >= 128: no im2col copy -- 9 accumulated MXU dots.
                z = jnp.zeros((Cout, Lout), jnp.float32)
                for t in range(9):
                    z = z + jnp.dot(wc_ref[:, t * Cout:(t + 1) * Cout], tap(p, t),
                                    preferred_element_type=jnp.float32)
            else:
                patches = jnp.concatenate([tap(p, t) for t in range(9)], axis=0)
                z = jnp.dot(wc_ref[...], patches,
                            preferred_element_type=jnp.float32)
            zl = _leaky(z + bc_ref[...])
            zm = zl * m2
            zsum = zsum + jnp.sum(zm, axis=1, keepdims=True)
            zsq = zsq + jnp.sum(zm * zl, axis=1, keepdims=True)
            z_list.append(zl)
        mean2 = zsum / cnt
        var2 = jnp.maximum(zsq / cnt - mean2 * mean2, 0.0)
        inv2 = lax.rsqrt(var2 + IN_EPS)
        for p, zl in enumerate(z_list):
            out_ref[0, :, p * Lout:(p + 1) * Lout] = \
                ((zl - mean2) * inv2).astype(out_ref.dtype)


def _round_wp(H, W):
    """Smallest padded row width >= W+2 making H*Wp a multiple of 128 (lane-dense
    output stores), unless that padding would be too wasteful."""
    base = W + 2
    step = 128 // math.gcd(H, 128)
    wp = ((base + step - 1) // step) * step
    if wp - base > max(16, base // 4):
        return base
    return wp


def _pick_vmem_limit_bytes():
    cap = 128 * 1024 * 1024
    try:
        cap = int(pltpu.get_tpu_info().vmem_capacity_bytes)
    except Exception:
        pass
    if cap <= 64 * 1024 * 1024:          # v7x-class parts
        return 40 * 1024 * 1024
    return 96 * 1024 * 1024              # v5e / v6e (128 MiB physical)


def msunet_up_block(x_nchw, wt, bt, wc, bc):
    """x_nchw: (N, Cin, H, W); wt: (Cin, Cout, 2, 2) [ConvTranspose2d.weight];
    bt: (Cout,); wc: (Cout, Cout, 3, 3) [Conv2d.weight]; bc: (Cout,).
    Returns (N, Cout, 2H, 2W) bfloat16 (NCHW)."""
    N, Cin, H, W = x_nchw.shape
    Cout = wt.shape[1]
    Wp = _round_wp(H, W)
    Sp = (H + 2) * Wp
    Lout = H * Wp

    # Zero-pad spatially (1 left/top/bottom, Wp-1-W right) and flatten spatial
    # onto the lane axis.  The zero ring doubles as the 3x3 conv padding.
    xp = jnp.pad(x_nchw, ((0, 0), (0, 0), (1, 1), (1, Wp - 1 - W)))
    xp = xp.reshape(N, Cin, Sp).astype(jnp.bfloat16)

    # wt[ci,co,a,b] -> (4*Cout, Cin), row = (2a+b)*Cout + co
    wtF = jnp.transpose(wt, (2, 3, 1, 0)).reshape(4 * Cout, Cin).astype(jnp.bfloat16)
    btF = jnp.tile(bt, 4).reshape(4 * Cout, 1).astype(jnp.float32)
    # wc[co,ci,dy,dx] -> (Cout, 9*Cout), col = (3dy+dx)*Cout + ci
    wcF = jnp.transpose(wc, (0, 2, 3, 1)).reshape(Cout, 9 * Cout).astype(jnp.bfloat16)
    bcF = bc.reshape(Cout, 1).astype(jnp.float32)

    # Masks: interior of the padded (H+2,Wp) grid / valid columns of (H,Wp).
    m1 = jnp.pad(jnp.ones((H, W), jnp.float32),
                 ((1, 1), (1, Wp - 1 - W))).reshape(1, Sp)
    m2 = jnp.tile(jnp.pad(jnp.ones((H, W), jnp.float32),
                          ((0, 0), (0, Wp - W))).reshape(1, Lout), (1, 4))

    accumulate_taps = Cout >= 128
    fuse_parities = (not accumulate_taps) and (9 * Cout * 4 * Lout * 2 <= 8 * 1024 * 1024)

    kernel = functools.partial(_msunet_up_kernel, H=H, W=W, Wp=Wp,
                               fuse_parities=fuse_parities,
                               accumulate_taps=accumulate_taps)

    out = pl.pallas_call(
        kernel,
        out_shape=jax.ShapeDtypeStruct((N, Cout, 4 * Lout), jnp.bfloat16),
        grid=(N,),
        in_specs=[
            pl.BlockSpec((1, Cin, Sp), lambda n: (n, 0, 0)),
            pl.BlockSpec((4 * Cout, Cin), lambda n: (0, 0)),
            pl.BlockSpec((4 * Cout, 1), lambda n: (0, 0)),
            pl.BlockSpec((Cout, 9 * Cout), lambda n: (0, 0)),
            pl.BlockSpec((Cout, 1), lambda n: (0, 0)),
            pl.BlockSpec((1, Sp), lambda n: (0, 0)),
            pl.BlockSpec((1, 4 * Lout), lambda n: (0, 0)),
        ],
        out_specs=pl.BlockSpec((1, Cout, 4 * Lout), lambda n: (n, 0, 0)),
        scratch_shapes=[pltpu.VMEM((4 * Cout, Sp + 2), jnp.bfloat16)],
        compiler_params=pltpu.CompilerParams(
            dimension_semantics=("parallel",),            # both v7x TCs get work
            vmem_limit_bytes=_pick_vmem_limit_bytes()),
    )(xp, wtF, btF, wcF, bcF, m1, m2)

    # Parity-separated lane-dense layout -> standard NCHW interleave (bf16; in a
    # full network this rearrangement would be fused into the consumer).
    out = out.reshape(N, Cout, 2, 2, H, Wp)[..., :W]      # (N, C, a, b, H, W)
    out = jnp.transpose(out, (0, 1, 4, 2, 5, 3))          # (N, C, H, a, W, b)
    return out.reshape(N, Cout, 2 * H, 2 * W)


# ------------------------- pure-JAX reference (for sanity) -------------------------
def _ref_forward(x, wt, bt, wc, bc):
    N, Cin, H, W = x.shape
    Cout = wt.shape[1]
    # ConvTranspose2d k=2 s=2
    y = jnp.einsum('nchw,cdab->ndhawb', x, wt).reshape(N, Cout, 2 * H, 2 * W)
    y = y + bt[None, :, None, None]
    y = jnp.where(y > 0, y, NEG_SLOPE * y)
    m = jnp.mean(y, axis=(2, 3), keepdims=True)
    v = jnp.mean((y - m) ** 2, axis=(2, 3), keepdims=True)
    y = (y - m) / jnp.sqrt(v + IN_EPS)
    # Conv2d 3x3 pad 1
    z = lax.conv_general_dilated(y, wc, (1, 1), [(1, 1), (1, 1)],
                                 dimension_numbers=('NCHW', 'OIHW', 'NCHW'))
    z = z + bc[None, :, None, None]
    z = jnp.where(z > 0, z, NEG_SLOPE * z)
    m = jnp.mean(z, axis=(2, 3), keepdims=True)
    v = jnp.mean((z - m) ** 2, axis=(2, 3), keepdims=True)
    return (z - m) / jnp.sqrt(v + IN_EPS)


if __name__ == "__main__":
    # Small shapes: N=2, in_size=8, out_size=4, spatial 16x16 -> output (2, 4, 32, 32)
    N, Cin, Cout, H, W = 2, 8, 4, 16, 16

    key = jax.random.PRNGKey(0)
    kx, k1, k2, k3, k4 = jax.random.split(key, 5)
    x = jax.random.normal(kx, (N, Cin, H, W), jnp.float32)

    # Deterministic synthetic parameters (PyTorch layout shapes).
    wt = 0.1 * jax.random.normal(k1, (Cin, Cout, 2, 2), jnp.float32)   # ConvTranspose2d.weight
    bt = 0.1 * jax.random.normal(k2, (Cout,), jnp.float32)             # ConvTranspose2d.bias
    wc = 0.1 * jax.random.normal(k3, (Cout, Cout, 3, 3), jnp.float32)  # Conv2d.weight
    bc = 0.1 * jax.random.normal(k4, (Cout,), jnp.float32)             # Conv2d.bias

    out = jax.block_until_ready(msunet_up_block(x, wt, bt, wc, bc))
    ref = _ref_forward(x, wt, bt, wc, bc)

    assert out.shape == (N, Cout, 2 * H, 2 * W), out.shape
    outf = out.astype(jnp.float32)
    err = float(jnp.max(jnp.abs(outf - ref)))
    # bf16 matmul operands + bf16 output with f32 accumulation/normalization:
    # error budget a few 1e-2.
    assert jnp.allclose(outf, ref, atol=7.5e-2, rtol=5e-2), err

    print("KERNEL_OK")
</pallas_src>

<mosaic_0001>
module attributes {stable_mosaic.version = 11 : i64} {
  func.func @_msunet_up_kernel(%arg0: i32, %arg1: memref<1x8x432xbf16, #tpu.memory_space<vmem>>, %arg2: memref<16x8xbf16, #tpu.memory_space<vmem>>, %arg3: memref<16x1xf32, #tpu.memory_space<vmem>>, %arg4: memref<4x36xbf16, #tpu.memory_space<vmem>>, %arg5: memref<4x1xf32, #tpu.memory_space<vmem>>, %arg6: memref<1x432xf32, #tpu.memory_space<vmem>>, %arg7: memref<1x1536xf32, #tpu.memory_space<vmem>>, %arg8: memref<1x4x1536xbf16, #tpu.memory_space<vmem>>, %arg9: memref<16x434xbf16, #tpu.memory_space<vmem>>) attributes {dimension_semantics = [#tpu.dimension_semantics<parallel>], iteration_bounds = array<i64: 2>, scalar_prefetch = 0 : i64, scratch_operands = 1 : i64, tpu.core_type = #tpu.core_type<tc>, window_params = [{transform_indices = @transform_0, window_bounds = array<i64: 1, 8, 432>}, {pipeline_mode = #tpu.pipeline_mode<synchronous>, transform_indices = @transform_1, window_bounds = array<i64: 16, 8>}, {pipeline_mode = #tpu.pipeline_mode<synchronous>, transform_indices = @transform_2, window_bounds = array<i64: 16, 1>}, {pipeline_mode = #tpu.pipeline_mode<synchronous>, transform_indices = @transform_3, window_bounds = array<i64: 4, 36>}, {pipeline_mode = #tpu.pipeline_mode<synchronous>, transform_indices = @transform_4, window_bounds = array<i64: 4, 1>}, {pipeline_mode = #tpu.pipeline_mode<synchronous>, transform_indices = @transform_5, window_bounds = array<i64: 1, 432>}, {pipeline_mode = #tpu.pipeline_mode<synchronous>, transform_indices = @transform_6, window_bounds = array<i64: 1, 1536>}, {transform_indices = @transform_7, window_bounds = array<i64: 1, 4, 1536>}]} {
    %c0 = arith.constant 0 : index
    %c0_0 = arith.constant 0 : index
    %0 = vector.load %arg2[%c0, %c0_0] : memref<16x8xbf16, #tpu.memory_space<vmem>>, vector<16x8xbf16>
    %c0_1 = arith.constant 0 : index
    %c0_2 = arith.constant 0 : index
    %c0_3 = arith.constant 0 : index
    %1 = vector.load %arg1[%c0_1, %c0_2, %c0_3] : memref<1x8x432xbf16, #tpu.memory_space<vmem>>, vector<1x8x432xbf16>
    %2 = vector.shape_cast %1 : vector<1x8x432xbf16> to vector<8x432xbf16>
    %cst = arith.constant dense<0.000000e+00> : vector<16x432xf32>
    %3 = tpu.matmul %0, %2, %cst {dimension_numbers = #tpu.dot_dimension_numbers<[1], [0], [0], [1], [0, 0, 1, 1], [], []>} : vector<16x8xbf16>, vector<8x432xbf16>, vector<16x432xf32> -> vector<16x432xf32>
    %c0_4 = arith.constant 0 : index
    %c0_5 = arith.constant 0 : index
    %4 = vector.load %arg3[%c0_4, %c0_5] : memref<16x1xf32, #tpu.memory_space<vmem>>, vector<16x1xf32>
    %5 = vector.broadcast %4 : vector<16x1xf32> to vector<16x432xf32>
    %6 = arith.addf %3, %5 : vector<16x432xf32>
    %cst_6 = arith.constant 0.000000e+00 : f32
    %7 = vector.broadcast %cst_6 : f32 to vector<16x432xf32>
    %8 = arith.cmpf ogt, %6, %7 : vector<16x432xf32>
    %cst_7 = arith.constant 0.00999999977 : f32
    %9 = vector.broadcast %cst_7 : f32 to vector<16x432xf32>
    %10 = arith.mulf %9, %6 : vector<16x432xf32>
    %11 = arith.select %8, %6, %10 : vector<16x432xi1>, vector<16x432xf32>
    %c0_8 = arith.constant 0 : index
    %c0_9 = arith.constant 0 : index
    %12 = vector.load %arg3[%c0_8, %c0_9] : memref<16x1xf32, #tpu.memory_space<vmem>>, vector<16x1xf32>
    %cst_10 = arith.constant 0.000000e+00 : f32
    %13 = vector.broadcast %cst_10 : f32 to vector<16x1xf32>
    %14 = arith.cmpf ogt, %12, %13 : vector<16x1xf32>
    %cst_11 = arith.constant 0.00999999977 : f32
    %15 = vector.broadcast %cst_11 : f32 to vector<16x1xf32>
    %16 = arith.mulf %15, %12 : vector<16x1xf32>
    %17 = arith.select %14, %12, %16 : vector<16x1xi1>, vector<16x1xf32>
    %cst_12 = arith.constant dense<0.000000e+00> : vector<16xf32>
    %18 = vector.multi_reduction <add>, %11, %cst_12 [1] : vector<16x432xf32> to vector<16xf32>
    %19 = vector.shape_cast %18 : vector<16xf32> to vector<16x1xf32>
    %cst_13 = arith.constant 1.760000e+02 : f32
    %20 = vector.broadcast %cst_13 : f32 to vector<16x1xf32>
    %21 = arith.mulf %20, %17 : vector<16x1xf32>
    %22 = arith.subf %19, %21 : vector<16x1xf32>
    %23 = arith.mulf %11, %11 : vector<16x432xf32>
    %cst_14 = arith.constant dense<0.000000e+00> : vector<16xf32>
    %24 = vector.multi_reduction <add>, %23, %cst_14 [1] : vector<16x432xf32> to vector<16xf32>
    %25 = vector.shape_cast %24 : vector<16xf32> to vector<16x1xf32>
    %26 = arith.mulf %17, %17 : vector<16x1xf32>
    %cst_15 = arith.constant 1.760000e+02 : f32
    %27 = vector.broadcast %cst_15 : f32 to vector<16x1xf32>
    %28 = arith.mulf %27, %26 : vector<16x1xf32>
    %29 = arith.subf %25, %28 : vector<16x1xf32>
    %30 = vector.extract_strided_slice %22 {offsets = [0, 0], sizes = [4, 1], strides = [1, 1]} : vector<16x1xf32> to vector<4x1xf32>
    %31 = vector.extract_strided_slice %22 {offsets = [4, 0], sizes = [4, 1], strides = [1, 1]} : vector<16x1xf32> to vector<4x1xf32>
    %32 = arith.addf %30, %31 : vector<4x1xf32>
    %33 = vector.extract_strided_slice %22 {offsets = [8, 0], sizes = [4, 1], strides = [1, 1]} : vector<16x1xf32> to vector<4x1xf32>
    %34 = arith.addf %32, %33 : vector<4x1xf32>
    %35 = vector.extract_strided_slice %22 {offsets = [12, 0], sizes = [4, 1], strides = [1, 1]} : vector<16x1xf32> to vector<4x1xf32>
    %36 = arith.addf %34, %35 : vector<4x1xf32>
    %37 = vector.extract_strided_slice %29 {offsets = [0, 0], sizes = [4, 1], strides = [1, 1]} : vector<16x1xf32> to vector<4x1xf32>
    %38 = vector.extract_strided_slice %29 {offsets = [4, 0], sizes = [4, 1], strides = [1, 1]} : vector<16x1xf32> to vector<4x1xf32>
    %39 = arith.addf %37, %38 : vector<4x1xf32>
    %40 = vector.extract_strided_slice %29 {offsets = [8, 0], sizes = [4, 1], strides = [1, 1]} : vector<16x1xf32> to vector<4x1xf32>
    %41 = arith.addf %39, %40 : vector<4x1xf32>
    %42 = vector.extract_strided_slice %29 {offsets = [12, 0], sizes = [4, 1], strides = [1, 1]} : vector<16x1xf32> to vector<4x1xf32>
    %43 = arith.addf %41, %42 : vector<4x1xf32>
    %cst_16 = arith.constant 1.024000e+03 : f32
    %44 = vector.broadcast %cst_16 : f32 to vector<4x1xf32>
    %45 = arith.divf %36, %44 : vector<4x1xf32>
    %cst_17 = arith.constant 1.024000e+03 : f32
    %46 = vector.broadcast %cst_17 : f32 to vector<4x1xf32>
    %47 = arith.divf %43, %46 : vector<4x1xf32>
    %48 = arith.mulf %45, %45 : vector<4x1xf32>
    %49 = arith.subf %47, %48 : vector<4x1xf32>
    %cst_18 = arith.constant 0.000000e+00 : f32
    %50 = vector.broadcast %cst_18 : f32 to vector<4x1xf32>
    %51 = arith.maximumf %49, %50 : vector<4x1xf32>
    %cst_19 = arith.constant 9.99999974E-6 : f32
    %52 = vector.broadcast %cst_19 : f32 to vector<4x1xf32>
    %53 = arith.addf %51, %52 : vector<4x1xf32>
    %54 = math.rsqrt %53 : vector<4x1xf32>
    %55 = tpu.concatenate %45, %45, %45, %45 in 0 : vector<4x1xf32>, vector<4x1xf32>, vector<4x1xf32>, vector<4x1xf32> -> vector<16x1xf32>
    %56 = tpu.concatenate %54, %54, %54, %54 in 0 : vector<4x1xf32>, vector<4x1xf32>, vector<4x1xf32>, vector<4x1xf32> -> vector<16x1xf32>
    %57 = vector.broadcast %55 : vector<16x1xf32> to vector<16x432xf32>
    %58 = arith.subf %11, %57 : vector<16x432xf32>
    %59 = vector.broadcast %56 : vector<16x1xf32> to vector<16x432xf32>
    %60 = arith.mulf %58, %59 : vector<16x432xf32>
    %c0_20 = arith.constant 0 : index
    %c0_21 = arith.constant 0 : index
    %61 = vector.load %arg6[%c0_20, %c0_21] : memref<1x432xf32, #tpu.memory_space<vmem>>, vector<1x432xf32>
    %62 = vector.broadcast %61 : vector<1x432xf32> to vector<16x432xf32>
    %63 = arith.mulf %60, %62 : vector<16x432xf32>
    %64 = arith.truncf %63 : vector<16x432xf32> to vector<16x432xbf16>
    %c0_22 = arith.constant 0 : index
    %c0_23 = arith.constant 0 : index
    %65 = vector.load %arg9[%c0_22, %c0_23] : memref<16x434xbf16, #tpu.memory_space<vmem>>, vector<16x432xbf16>
    tpu.vector_store %arg9[%c0_22, %c0_23], %64 {strides = array<i32>} : memref<16x434xbf16, #tpu.memory_space<vmem>>, vector<16x432xbf16>,
    %cst_24 = arith.constant 0.000000e+00 : bf16
    %66 = vector.broadcast %cst_24 : bf16 to vector<16x2xbf16>
    %c0_25 = arith.constant 0 : index
    %c432 = arith.constant 432 : index
    %67 = vector.load %arg9[%c0_25, %c432] : memref<16x434xbf16, #tpu.memory_space<vmem>>, vector<16x2xbf16>
    tpu.vector_store %arg9[%c0_25, %c432], %66 {strides = array<i32>} : memref<16x434xbf16, #tpu.memory_space<vmem>>, vector<16x2xbf16>,
    %c12 = arith.constant 12 : index
    %c0_26 = arith.constant 0 : index
    %68 = vector.load %arg9[%c12, %c0_26] : memref<16x434xbf16, #tpu.memory_space<vmem>>, vector<4x384xbf16>
    %c8 = arith.constant 8 : index
    %c1 = arith.constant 1 : index
    %69 = vector.load %arg9[%c8, %c1] : memref<16x434xbf16, #tpu.memory_space<vmem>>, vector<4x384xbf16>
    %c4 = arith.constant 4 : index
    %c24 = arith.constant 24 : index
    %70 = vector.load %arg9[%c4, %c24] : memref<16x434xbf16, #tpu.memory_space<vmem>>, vector<4x384xbf16>
    %c0_27 = arith.constant 0 : index
    %c25 = arith.constant 25 : index
    %71 = vector.load %arg9[%c0_27, %c25] : memref<16x434xbf16, #tpu.memory_space<vmem>>, vector<4x384xbf16>
    %72 = tpu.concatenate %68, %69, %70, %71 in 1 : vector<4x384xbf16>, vector<4x384xbf16>, vector<4x384xbf16>, vector<4x384xbf16> -> vector<4x1536xbf16>
    %c8_28 = arith.constant 8 : index
    %c1_29 = arith.constant 1 : index
    %73 = vector.load %arg9[%c8_28, %c1_29] : memref<16x434xbf16, #tpu.memory_space<vmem>>, vector<4x384xbf16>
    %c12_30 = arith.constant 12 : index
    %c1_31 = arith.constant 1 : index
    %74 = vector.load %arg9[%c12_30, %c1_31] : memref<16x434xbf16, #tpu.memory_space<vmem>>, vector<4x384xbf16>
    %c0_32 = arith.constant 0 : index
    %c25_33 = arith.constant 25 : index
    %75 = vector.load %arg9[%c0_32, %c25_33] : memref<16x434xbf16, #tpu.memory_space<vmem>>, vector<4x384xbf16>
    %c4_34 = arith.constant 4 : index
    %c25_35 = arith.constant 25 : index
    %76 = vector.load %arg9[%c4_34, %c25_35] : memref<16x434xbf16, #tpu.memory_space<vmem>>, vector<4x384xbf16>
    %77 = tpu.concatenate %73, %74, %75, %76 in 1 : vector<4x384xbf16>, vector<4x384xbf16>, vector<4x384xbf16>, vector<4x384xbf16> -> vector<4x1536xbf16>
    %c12_36 = arith.constant 12 : index
    %c1_37 = arith.constant 1 : index
    %78 = vector.load %arg9[%c12_36, %c1_37] : memref<16x434xbf16, #tpu.memory_space<vmem>>, vector<4x384xbf16>
    %c8_38 = arith.constant 8 : index
    %c2 = arith.constant 2 : index
    %79 = vector.load %arg9[%c8_38, %c2] : memref<16x434xbf16, #tpu.memory_space<vmem>>, vector<4x384xbf16>
    %c4_39 = arith.constant 4 : index
    %c25_40 = arith.constant 25 : index
    %80 = vector.load %arg9[%c4_39, %c25_40] : memref<16x434xbf16, #tpu.memory_space<vmem>>, vector<4x384xbf16>
    %c0_41 = arith.constant 0 : index
    %c26 = arith.constant 26 : index
    %81 = vector.load %arg9[%c0_41, %c26] : memref<16x434xbf16, #tpu.memory_space<vmem>>, vector<4x384xbf16>
    %82 = tpu.concatenate %78, %79, %80, %81 in 1 : vector<4x384xbf16>, vector<4x384xbf16>, vector<4x384xbf16>, vector<4x384xbf16> -> vector<4x1536xbf16>
    %c4_42 = arith.constant 4 : index
    %c24_43 = arith.constant 24 : index
    %83 = vector.load %arg9[%c4_42, %c24_43] : memref<16x434xbf16, #tpu.memory_space<vmem>>, vector<4x384xbf16>
    %c0_44 = arith.constant 0 : index
    %c25_45 = arith.constant 25 : index
    %84 = vector.load %arg9[%c0_44, %c25_45] : memref<16x434xbf16, #tpu.memory_space<vmem>>, vector<4x384xbf16>
    %c12_46 = arith.constant 12 : index
    %c24_47 = arith.constant 24 : index
    %85 = vector.load %arg9[%c12_46, %c24_47] : memref<16x434xbf16, #tpu.memory_space<vmem>>, vector<4x384xbf16>
    %c8_48 = arith.constant 8 : index
    %c25_49 = arith.constant 25 : index
    %86 = vector.load %arg9[%c8_48, %c25_49] : memref<16x434xbf16, #tpu.memory_space<vmem>>, vector<4x384xbf16>
    %87 = tpu.concatenate %83, %84, %85, %86 in 1 : vector<4x384xbf16>, vector<4x384xbf16>, vector<4x384xbf16>, vector<4x384xbf16> -> vector<4x1536xbf16>
    %c0_50 = arith.constant 0 : index
    %c25_51 = arith.constant 25 : index
    %88 = vector.load %arg9[%c0_50, %c25_51] : memref<16x434xbf16, #tpu.memory_space<vmem>>, vector<4x384xbf16>
    %c4_52 = arith.constant 4 : index
    %c25_53 = arith.constant 25 : index
    %89 = vector.load %arg9[%c4_52, %c25_53] : memref<16x434xbf16, #tpu.memory_space<vmem>>, vector<4x384xbf16>
    %c8_54 = arith.constant 8 : index
    %c25_55 = arith.constant 25 : index
    %90 = vector.load %arg9[%c8_54, %c25_55] : memref<16x434xbf16, #tpu.memory_space<vmem>>, vector<4x384xbf16>
    %c12_56 = arith.constant 12 : index
    %c25_57 = arith.constant 25 : index
    %91 = vector.load %arg9[%c12_56, %c25_57] : memref<16x434xbf16, #tpu.memory_space<vmem>>, vector<4x384xbf16>
    %92 = tpu.concatenate %88, %89, %90, %91 in 1 : vector<4x384xbf16>, vector<4x384xbf16>, vector<4x384xbf16>, vector<4x384xbf16> -> vector<4x1536xbf16>
    %c4_58 = arith.constant 4 : index
    %c25_59 = arith.constant 25 : index
    %93 = vector.load %arg9[%c4_58, %c25_59] : memref<16x434xbf16, #tpu.memory_space<vmem>>, vector<4x384xbf16>
    %c0_60 = arith.constant 0 : index
    %c26_61 = arith.constant 26 : index
    %94 = vector.load %arg9[%c0_60, %c26_61] : memref<16x434xbf16, #tpu.memory_space<vmem>>, vector<4x384xbf16>
    %c12_62 = arith.constant 12 : index
    %c25_63 = arith.constant 25 : index
    %95 = vector.load %arg9[%c12_62, %c25_63] : memref<16x434xbf16, #tpu.memory_space<vmem>>, vector<4x384xbf16>
    %c8_64 = arith.constant 8 : index
    %c26_65 = arith.constant 26 : index
    %96 = vector.load %arg9[%c8_64, %c26_65] : memref<16x434xbf16, #tpu.memory_space<vmem>>, vector<4x384xbf16>
    %97 = tpu.concatenate %93, %94, %95, %96 in 1 : vector<4x384xbf16>, vector<4x384xbf16>, vector<4x384xbf16>, vector<4x384xbf16> -> vector<4x1536xbf16>
    %c12_66 = arith.constant 12 : index
    %c24_67 = arith.constant 24 : index
    %98 = vector.load %arg9[%c12_66, %c24_67] : memref<16x434xbf16, #tpu.memory_space<vmem>>, vector<4x384xbf16>
    %c8_68 = arith.constant 8 : index
    %c25_69 = arith.constant 25 : index
    %99 = vector.load %arg9[%c8_68, %c25_69] : memref<16x434xbf16, #tpu.memory_space<vmem>>, vector<4x384xbf16>
    %c4_70 = arith.constant 4 : index
    %c48 = arith.constant 48 : index
    %100 = vector.load %arg9[%c4_70, %c48] : memref<16x434xbf16, #tpu.memory_space<vmem>>, vector<4x384xbf16>
    %c0_71 = arith.constant 0 : index
    %c49 = arith.constant 49 : index
    %101 = vector.load %arg9[%c0_71, %c49] : memref<16x434xbf16, #tpu.memory_space<vmem>>, vector<4x384xbf16>
    %102 = tpu.concatenate %98, %99, %100, %101 in 1 : vector<4x384xbf16>, vector<4x384xbf16>, vector<4x384xbf16>, vector<4x384xbf16> -> vector<4x1536xbf16>
    %c8_72 = arith.constant 8 : index
    %c25_73 = arith.constant 25 : index
    %103 = vector.load %arg9[%c8_72, %c25_73] : memref<16x434xbf16, #tpu.memory_space<vmem>>, vector<4x384xbf16>
    %c12_74 = arith.constant 12 : index
    %c25_75 = arith.constant 25 : index
    %104 = vector.load %arg9[%c12_74, %c25_75] : memref<16x434xbf16, #tpu.memory_space<vmem>>, vector<4x384xbf16>
    %c0_76 = arith.constant 0 : index
    %c49_77 = arith.constant 49 : index
    %105 = vector.load %arg9[%c0_76, %c49_77] : memref<16x434xbf16, #tpu.memory_space<vmem>>, vector<4x384xbf16>
    %c4_78 = arith.constant 4 : index
    %c49_79 = arith.constant 49 : index
    %106 = vector.load %arg9[%c4_78, %c49_79] : memref<16x434xbf16, #tpu.memory_space<vmem>>, vector<4x384xbf16>
    %107 = tpu.concatenate %103, %104, %105, %106 in 1 : vector<4x384xbf16>, vector<4x384xbf16>, vector<4x384xbf16>, vector<4x384xbf16> -> vector<4x1536xbf16>
    %c12_80 = arith.constant 12 : index
    %c25_81 = arith.constant 25 : index
    %108 = vector.load %arg9[%c12_80, %c25_81] : memref<16x434xbf16, #tpu.memory_space<vmem>>, vector<4x384xbf16>
    %c8_82 = arith.constant 8 : index
    %c26_83 = arith.constant 26 : index
    %109 = vector.load %arg9[%c8_82, %c26_83] : memref<16x434xbf16, #tpu.memory_space<vmem>>, vector<4x384xbf16>
    %c4_84 = arith.constant 4 : index
    %c49_85 = arith.constant 49 : index
    %110 = vector.load %arg9[%c4_84, %c49_85] : memref<16x434xbf16, #tpu.memory_space<vmem>>, vector<4x384xbf16>
    %c0_86 = arith.constant 0 : index
    %c50 = arith.constant 50 : index
    %111 = vector.load %arg9[%c0_86, %c50] : memref<16x434xbf16, #tpu.memory_space<vmem>>, vector<4x384xbf16>
    %112 = tpu.concatenate %108, %109, %110, %111 in 1 : vector<4x384xbf16>, vector<4x384xbf16>, vector<4x384xbf16>, vector<4x384xbf16> -> vector<4x1536xbf16>
    %113 = tpu.concatenate %72, %77, %82, %87, %92, %97, %102, %107, %112 in 0 : vector<4x1536xbf16>, vector<4x1536xbf16>, vector<4x1536xbf16>, vector<4x1536xbf16>, vector<4x1536xbf16>, vector<4x1536xbf16>, vector<4x1536xbf16>, vector<4x1536xbf16>, vector<4x1536xbf16> -> vector<36x1536xbf16>
    %c0_87 = arith.constant 0 : index
    %c0_88 = arith.constant 0 : index
    %114 = vector.load %arg4[%c0_87, %c0_88] : memref<4x36xbf16, #tpu.memory_space<vmem>>, vector<4x36xbf16>
    %cst_89 = arith.constant dense<0.000000e+00> : vector<4x1536xf32>
    %115 = tpu.matmul %114, %113, %cst_89 {dimension_numbers = #tpu.dot_dimension_numbers<[1], [0], [0], [1], [0, 0, 1, 1], [], []>} : vector<4x36xbf16>, vector<36x1536xbf16>, vector<4x1536xf32> -> vector<4x1536xf32>
    %c0_90 = arith.constant 0 : index
    %c0_91 = arith.constant 0 : index
    %116 = vector.load %arg5[%c0_90, %c0_91] : memref<4x1xf32, #tpu.memory_space<vmem>>, vector<4x1xf32>
    %117 = vector.broadcast %116 : vector<4x1xf32> to vector<4x1536xf32>
    %118 = arith.addf %115, %117 : vector<4x1536xf32>
    %cst_92 = arith.constant 0.000000e+00 : f32
    %119 = vector.broadcast %cst_92 : f32 to vector<4x1536xf32>
    %120 = arith.cmpf ogt, %118, %119 : vector<4x1536xf32>
    %cst_93 = arith.constant 0.00999999977 : f32
    %121 = vector.broadcast %cst_93 : f32 to vector<4x1536xf32>
    %122 = arith.mulf %121, %118 : vector<4x1536xf32>
    %123 = arith.select %120, %118, %122 : vector<4x1536xi1>, vector<4x1536xf32>
    %c0_94 = arith.constant 0 : index
    %c0_95 = arith.constant 0 : index
    %124 = vector.load %arg7[%c0_94, %c0_95] : memref<1x1536xf32, #tpu.memory_space<vmem>>, vector<1x1536xf32>
    %125 = vector.broadcast %124 : vector<1x1536xf32> to vector<4x1536xf32>
    %126 = arith.mulf %123, %125 : vector<4x1536xf32>
    %cst_96 = arith.constant dense<0.000000e+00> : vector<4xf32>
    %127 = vector.multi_reduction <add>, %126, %cst_96 [1] : vector<4x1536xf32> to vector<4xf32>
    %128 = vector.shape_cast %127 : vector<4xf32> to vector<4x1xf32>
    %cst_97 = arith.constant 1.024000e+03 : f32
    %129 = vector.broadcast %cst_97 : f32 to vector<4x1xf32>
    %130 = arith.divf %128, %129 : vector<4x1xf32>
    %131 = arith.mulf %126, %123 : vector<4x1536xf32>
    %cst_98 = arith.constant dense<0.000000e+00> : vector<4xf32>
    %132 = vector.multi_reduction <add>, %131, %cst_98 [1] : vector<4x1536xf32> to vector<4xf32>
    %133 = vector.shape_cast %132 : vector<4xf32> to vector<4x1xf32>
    %cst_99 = arith.constant 1.024000e+03 : f32
    %134 = vector.broadcast %cst_99 : f32 to vector<4x1xf32>
    %135 = arith.divf %133, %134 : vector<4x1xf32>
    %136 = arith.mulf %130, %130 : vector<4x1xf32>
    %137 = arith.subf %135, %136 : vector<4x1xf32>
    %cst_100 = arith.constant 0.000000e+00 : f32
    %138 = vector.broadcast %cst_100 : f32 to vector<4x1xf32>
    %139 = arith.maximumf %137, %138 : vector<4x1xf32>
    %cst_101 = arith.constant 9.99999974E-6 : f32
    %140 = vector.broadcast %cst_101 : f32 to vector<4x1xf32>
    %141 = arith.addf %139, %140 : vector<4x1xf32>
    %142 = math.rsqrt %141 : vector<4x1xf32>
    %143 = vector.broadcast %130 : vector<4x1xf32> to vector<4x1536xf32>
    %144 = arith.subf %123, %143 : vector<4x1536xf32>
    %145 = vector.broadcast %142 : vector<4x1xf32> to vector<4x1536xf32>
    %146 = arith.mulf %144, %145 : vector<4x1536xf32>
    %147 = arith.truncf %146 : vector<4x1536xf32> to vector<4x1536xbf16>
    %c0_102 = arith.constant 0 : index
    %c0_103 = arith.constant 0 : index
    %c0_104 = arith.constant 0 : index
    %148 = vector.load %arg8[%c0_102, %c0_103, %c0_104] : memref<1x4x1536xbf16, #tpu.memory_space<vmem>>, vector<1x4x1536xbf16>
    %149 = vector.shape_cast %148 : vector<1x4x1536xbf16> to vector<4x1536xbf16>
    %150 = vector.shape_cast %147 : vector<4x1536xbf16> to vector<1x4x1536xbf16>
    tpu.vector_store %arg8[%c0_102, %c0_103, %c0_104], %150 {strides = array<i32>} : memref<1x4x1536xbf16, #tpu.memory_space<vmem>>, vector<1x4x1536xbf16>,
    return
  }
  func.func @transform_0(%arg0: i32) -> (i32, i32, i32) {
    %c0_i32 = arith.constant 0 : i32
    %c0_i32_0 = arith.constant 0 : i32
    %c0_i32_1 = arith.constant 0 : i32
    return %arg0, %c0_i32, %c0_i32_0 : i32, i32, i32
  }
  func.func @transform_1(%arg0: i32) -> (i32, i32) {
    %c0_i32 = arith.constant 0 : i32
    %c0_i32_0 = arith.constant 0 : i32
    %c0_i32_1 = arith.constant 0 : i32
    return %c0_i32, %c0_i32_0 : i32, i32
  }
  func.func @transform_2(%arg0: i32) -> (i32, i32) {
    %c0_i32 = arith.constant 0 : i32
    %c0_i32_0 = arith.constant 0 : i32
    %c0_i32_1 = arith.constant 0 : i32
    return %c0_i32, %c0_i32_0 : i32, i32
  }
  func.func @transform_3(%arg0: i32) -> (i32, i32) {
    %c0_i32 = arith.constant 0 : i32
    %c0_i32_0 = arith.constant 0 : i32
    %c0_i32_1 = arith.constant 0 : i32
    return %c0_i32, %c0_i32_0 : i32, i32
  }
  func.func @transform_4(%arg0: i32) -> (i32, i32) {
    %c0_i32 = arith.constant 0 : i32
    %c0_i32_0 = arith.constant 0 : i32
    %c0_i32_1 = arith.constant 0 : i32
    return %c0_i32, %c0_i32_0 : i32, i32
  }
  func.func @transform_5(%arg0: i32) -> (i32, i32) {
    %c0_i32 = arith.constant 0 : i32
    %c0_i32_0 = arith.constant 0 : i32
    %c0_i32_1 = arith.constant 0 : i32
    return %c0_i32, %c0_i32_0 : i32, i32
  }
  func.func @transform_6(%arg0: i32) -> (i32, i32) {
    %c0_i32 = arith.constant 0 : i32
    %c0_i32_0 = arith.constant 0 : i32
    %c0_i32_1 = arith.constant 0 : i32
    return %c0_i32, %c0_i32_0 : i32, i32
  }
  func.func @transform_7(%arg0: i32) -> (i32, i32, i32) {
    %c0_i32 = arith.constant 0 : i32
    %c0_i32_0 = arith.constant 0 : i32
    %c0_i32_1 = arith.constant 0 : i32
    return %arg0, %c0_i32, %c0_i32_0 : i32, i32, i32
  }
}

</mosaic_0001>

<llo_original>
// kernel: tpu_custom_call.1
$region0: #{tpu_custom_call.1}
  #allocation0 [shape = 'u32[]', space=smem, size = 0x4, offset = 0x4, fixed_abs, tag = 'smem constant byte address 0x4 - core index']
  #allocation1 [shape = 'u32[144,128]{1,0:T(1,128)}', space=vmem, size = 0x12000, scoped, tag = 'internal scratch']
  #allocation2 [shape = 'bf16[16,434]{1,0:T(8,128)(2,1)}', space=vmem, size = 0x4000, scoped, tag = 'scratch operand']
  %s0 = inlined_call_operand.vmem [shape: bf16[2,8,432], index: 0, kind: input, shape index: {}]
  %s1 = inlined_call_operand.vmem [shape: bf16[16,8], index: 1, kind: input, shape index: {}]
  %s2 = inlined_call_operand.vmem [shape: f32[16,1], index: 2, kind: input, shape index: {}]
  %s3 = inlined_call_operand.hbm [shape: bf16[4,36], index: 3, kind: input, shape index: {}]
  %s4 = inlined_call_operand.vmem [shape: f32[4,1], index: 4, kind: input, shape index: {}]
  %s5 = inlined_call_operand.hbm [shape: f32[1,432], index: 5, kind: input, shape index: {}]
  %s6 = inlined_call_operand.vmem [shape: f32[1,1536], index: 6, kind: input, shape index: {}]
  %s7 = inlined_call_operand.hbm [shape: bf16[2,4,1536], index: 7, kind: output, shape index: {}]
  %s8 = sld [smem:[#allocation0]]
  $region69: #{tpu_custom_call.1} parent=0
    _
  %s10 = ssub.s32 1, %s8
  %s11 = scalar_select 0, %s10, %s8
  $region1: #{tpu_custom_call.1} parent=0
    #allocation3 [shape = 'u8[1024]{0}', space=vmem, size = 0x400, scoped, tag = 'input window, operand 3, single buffered']
    #allocation4 [shape = 's32[2]{0}', space=sflag, size = 0x8, scoped, tag = 'scoped memory for tpu_custom_call.1']
    #allocation5 [shape = 's32[2]{0}', space=sflag, size = 0x8, scoped, tag = 'scoped memory for tpu_custom_call.1']
    #allocation6 [shape = 'u8[2048]{0}', space=vmem, size = 0x800, scoped, tag = 'input window, operand 5, single buffered']
    #allocation7 [shape = 's32[1]{0}', space=sflag, size = 0x4, scoped, tag = 'scoped memory for tpu_custom_call.1']
    #allocation8 [shape = 'u8[24576]{0}', space=vmem, size = 0x6000, scoped, tag = 'output window, operand 0']
    %12 = vsyncpa [#allocation4], 0
    %13 = vsyncpa [#allocation7], 0
    %14 = vsyncpa [#allocation5], 0
    %s15 = scalar_lea.sflag [#allocation5], 1
    %16 = vsyncpa %s15, 0
    loop: start=0, step=1, limit=4
    $region2: #{tpu_custom_call.1} parent=1 // loop_pre_header
      _
    $region3: #{tpu_custom_call.1} parent=1 // loop_header
      %s18 = sphi 0, %s22
      %p19 = scmp.ge.s32.totalorder %s18, 4
      %s28 = sphi 0, %s30
      %s31 = sphi 0, %s28
      %s32 = sphi 0, %s31
      %s48 = sphi 0, %s32
      %s52 = sphi 0, %s52
      %s54 = sphi 0, %s52
      %s55 = sphi 0, %s54
      %s69 = sphi 0, %s55
      %s73 = sphi 0, %s73
      %s75 = sphi 0, %s73
      %s76 = sphi 0, %s75
      %s90 = sphi 0, %s76
      %s94 = sphi 0, %s94
      %s96 = sphi 0, %s94
      %s97 = sphi 0, %s96
      %s111 = sphi 0, %s97
      %s115 = sphi 0, %s115
      %s117 = sphi 0, %s115
      %s118 = sphi 0, %s117
      %s132 = sphi 0, %s118
      %s136 = sphi 0, %s136
      %s138 = sphi 0, %s136
      %s139 = sphi 0, %s138
      %s153 = sphi 0, %s139
      %s157 = sphi 0, %s157
      %s159 = sphi 0, %s157
      %s160 = sphi 0, %s159
      %s174 = sphi 0, %s160
      %s180 = sphi 0, %s182
      %s183 = sphi 0, %s180
      %s184 = sphi 0, %s183
      %s200 = sphi 0, %s184
    $region4: #{tpu_custom_call.1} parent=1 // loop_header_branch
      %21 = sbr.rel (%p19) target = $region8
    $region5: #{tpu_custom_call.1} parent=1 // loop_body
      %s23 = ssub.s32 %s18, 1
      %s24 = ssub.s32 %s18, 2
      %s25 = sadd.s32 %s18, 1
      %s26 = ssub.s32 %s18, %s25
      %p27 = scmp.eq.s32.totalorder %s26, 0
      %s29 = sadd.s32 %s28, 1
      %s30 = scalar_select %p27, %s28, %s29
      %p33 = pneg %p27
      %p34 = scmp.eq.s32.totalorder %s18, 1
      %p35 = por %p33, %p34
      %p36 = scmp.ne.s32.totalorder %s28, %s31
      %p37 = scmp.eq.s32.totalorder %s18, 0
      %p38 = por %p36, %p37
      %p39 = scmp.ne.s32.totalorder %s28, %s31
      %p40 = scmp.eq.s32.totalorder %s23, 1
      %p41 = por %p39, %p40
      %p42 = scmp.ne.s32.totalorder %s31, %s32
      %p43 = scmp.eq.s32.totalorder %s23, 0
      %p44 = por %p42, %p43
      %p45 = scmp.ne.s32.totalorder %s31, %s32
      %p46 = scmp.eq.s32.totalorder %s24, 1
      %p47 = por %p45, %p46
      %p49 = scmp.ne.s32.totalorder %s32, %s48
      %p50 = scmp.eq.s32.totalorder %s24, 0
      %p51 = por %p49, %p50
      %s53 = sadd.s32 %s52, 1
      %p56 = scmp.eq.s32.totalorder %s18, 1
      %p57 = scmp.ne.s32.totalorder %s52, %s54
      %p58 = scmp.eq.s32.totalorder %s18, 0
      %p59 = por %p57, %p58
      %p60 = scmp.ne.s32.totalorder %s52, %s54
      %p61 = scmp.eq.s32.totalorder %s23, 1
      %p62 = por %p60, %p61
      %p63 = scmp.ne.s32.totalorder %s54, %s55
      %p64 = scmp.eq.s32.totalorder %s23, 0
      %p65 = por %p63, %p64
      %p66 = scmp.ne.s32.totalorder %s54, %s55
      %p67 = scmp.eq.s32.totalorder %s24, 1
      %p68 = por %p66, %p67
      %p70 = scmp.ne.s32.totalorder %s55, %s69
      %p71 = scmp.eq.s32.totalorder %s24, 0
      %p72 = por %p70, %p71
      %s74 = sadd.s32 %s73, 1
      %p77 = scmp.eq.s32.totalorder %s18, 1
      %p78 = scmp.ne.s32.totalorder %s73, %s75
      %p79 = scmp.eq.s32.totalorder %s18, 0
      %p80 = por %p78, %p79
      %p81 = scmp.ne.s32.totalorder %s73, %s75
      %p82 = scmp.eq.s32.totalorder %s23, 1
      %p83 = por %p81, %p82
      %p84 = scmp.ne.s32.totalorder %s75, %s76
      %p85 = scmp.eq.s32.totalorder %s23, 0
      %p86 = por %p84, %p85
      %p87 = scmp.ne.s32.totalorder %s75, %s76
      %p88 = scmp.eq.s32.totalorder %s24, 1
      %p89 = por %p87, %p88
      %p91 = scmp.ne.s32.totalorder %s76, %s90
      %p92 = scmp.eq.s32.totalorder %s24, 0
      %p93 = por %p91, %p92
      %s95 = sadd.s32 %s94, 1
      %p98 = scmp.eq.s32.totalorder %s18, 1
      %p99 = scmp.ne.s32.totalorder %s94, %s96
      %p100 = scmp.eq.s32.totalorder %s18, 0
      %p101 = por %p99, %p100
      %p102 = scmp.ne.s32.totalorder %s94, %s96
      %p103 = scmp.eq.s32.totalorder %s23, 1
      %p104 = por %p102, %p103
      %p105 = scmp.ne.s32.totalorder %s96, %s97
      %p106 = scmp.eq.s32.totalorder %s23, 0
      %p107 = por %p105, %p106
      %p108 = scmp.ne.s32.totalorder %s96, %s97
      %p109 = scmp.eq.s32.totalorder %s24, 1
      %p110 = por %p108, %p109
      %p112 = scmp.ne.s32.totalorder %s97, %s111
      %p113 = scmp.eq.s32.totalorder %s24, 0
      %p114 = por %p112, %p113
      %s116 = sadd.s32 %s115, 1
      %p119 = scmp.eq.s32.totalorder %s18, 1
      %p120 = scmp.ne.s32.totalorder %s115, %s117
      %p121 = scmp.eq.s32.totalorder %s18, 0
      %p122 = por %p120, %p121
      %p123 = scmp.ne.s32.totalorder %s115, %s117
      %p124 = scmp.eq.s32.totalorder %s23, 1
      %p125 = por %p123, %p124
      %p126 = scmp.ne.s32.totalorder %s117, %s118
      %p127 = scmp.eq.s32.totalorder %s23, 0
      %p128 = por %p126, %p127
      %p129 = scmp.ne.s32.totalorder %s117, %s118
      %p130 = scmp.eq.s32.totalorder %s24, 1
      %p131 = por %p129, %p130
      %p133 = scmp.ne.s32.totalorder %s118, %s132
      %p134 = scmp.eq.s32.totalorder %s24, 0
      %p135 = por %p133, %p134
      %s137 = sadd.s32 %s136, 1
      %p140 = scmp.eq.s32.totalorder %s18, 1
      %p141 = scmp.ne.s32.totalorder %s136, %s138
      %p142 = scmp.eq.s32.totalorder %s18, 0
      %p143 = por %p141, %p142
      %p144 = scmp.ne.s32.totalorder %s136, %s138
      %p145 = scmp.eq.s32.totalorder %s23, 1
      %p146 = por %p144, %p145
      %p147 = scmp.ne.s32.totalorder %s138, %s139
      %p148 = scmp.eq.s32.totalorder %s23, 0
      %p149 = por %p147, %p148
      %p150 = scmp.ne.s32.totalorder %s138, %s139
      %p151 = scmp.eq.s32.totalorder %s24, 1
      %p152 = por %p150, %p151
      %p154 = scmp.ne.s32.totalorder %s139, %s153
      %p155 = scmp.eq.s32.totalorder %s24, 0
      %p156 = por %p154, %p155
      %s158 = sadd.s32 %s157, 1
      %p161 = scmp.eq.s32.totalorder %s18, 1
      %p162 = scmp.ne.s32.totalorder %s157, %s159
      %p163 = scmp.eq.s32.totalorder %s18, 0
      %p164 = por %p162, %p163
      %p165 = scmp.ne.s32.totalorder %s157, %s159
      %p166 = scmp.eq.s32.totalorder %s23, 1
      %p167 = por %p165, %p166
      %p168 = scmp.ne.s32.totalorder %s159, %s160
      %p169 = scmp.eq.s32.totalorder %s23, 0
      %p170 = por %p168, %p169
      %p171 = scmp.ne.s32.totalorder %s159, %s160
      %p172 = scmp.eq.s32.totalorder %s24, 1
      %p173 = por %p171, %p172
      %p175 = scmp.ne.s32.totalorder %s160, %s174
      %p176 = scmp.eq.s32.totalorder %s24, 0
      %p177 = por %p175, %p176
      %s178 = ssub.s32 %s18, %s25
      %p179 = scmp.eq.s32.totalorder %s178, 0
      %s181 = sadd.s32 %s180, 1
      %s182 = scalar_select %p179, %s180, %s181
      %p185 = pneg %p179
      %p186 = scmp.eq.s32.totalorder %s18, 1
      %p187 = por %p185, %p186
      %p188 = scmp.ne.s32.totalorder %s180, %s183
      %p189 = scmp.eq.s32.totalorder %s18, 0
      %p190 = por %p188, %p189
      %p191 = scmp.ne.s32.totalorder %s180, %s183
      %p192 = scmp.eq.s32.totalorder %s23, 1
      %p193 = por %p191, %p192
      %p194 = scmp.ne.s32.totalorder %s183, %s184
      %p195 = scmp.eq.s32.totalorder %s23, 0
      %p196 = por %p194, %p195
      %p197 = scmp.ne.s32.totalorder %s183, %s184
      %p198 = scmp.eq.s32.totalorder %s24, 1
      %p199 = por %p197, %p198
      %p201 = scmp.ne.s32.totalorder %s184, %s200
      %p202 = scmp.eq.s32.totalorder %s24, 0
      %p203 = por %p201, %p202
      %p204 = scmp.le.s32.totalorder 1, %s18
      %p205 = scmp.lt.s32.totalorder %s18, 3
      %p206 = pnand %p204, %p205
      %p207 = pneg %p206
      // Predicated region
      $region9: #{tpu_custom_call.1} parent=5 // pred_check
        _
      $region10: #{tpu_custom_call.1} parent=5 // pred_check_branch
        %209 = sbr.rel (%p206) target = $region12
      $region11: #{tpu_custom_call.1} parent=5 // pred_region
        %s210 = ssub.s32 %s18, 1
        // Predicated region
        $region13: #{tpu_custom_call.1} parent=11 // pred_check
          %p211 = pneg %p65
        $region14: #{tpu_custom_call.1} parent=11 // pred_check_branch
          %213 = sbr.rel (%p211) target = $region16
        $region15: #{tpu_custom_call.1} parent=11 // pred_region
          _
        $region16: #{tpu_custom_call.1} parent=11 // pred_fallthru
          _
        // Predicated region
        $region17: #{tpu_custom_call.1} parent=11 // pred_check
          %p214 = pneg %p86
        $region18: #{tpu_custom_call.1} parent=11 // pred_check_branch
          %216 = sbr.rel (%p214) target = $region20
        $region19: #{tpu_custom_call.1} parent=11 // pred_region
          _
        $region20: #{tpu_custom_call.1} parent=11 // pred_fallthru
          _
        // Predicated region
        $region21: #{tpu_custom_call.1} parent=11 // pred_check
          %p217 = pneg %p107
        $region22: #{tpu_custom_call.1} parent=11 // pred_check_branch
          %219 = sbr.rel (%p217) target = $region24
        $region23: #{tpu_custom_call.1} parent=11 // pred_region
          %s221 = ssub.s32 32, 32
          %222 = vsyncadd [#allocation4], %s221
          %s224 = sshll.u32 [#allocation3], 4
          %s225 = int_to_ptr.vmem [resolvable:$true] %s224
          %227 = dma.hbm_to_vmem [thread:$0]  %s3, 32, %s225, [#allocation4]
        $region24: #{tpu_custom_call.1} parent=11 // pred_fallthru
          _
        // Predicated region
        $region25: #{tpu_custom_call.1} parent=11 // pred_check
          %p228 = pneg %p128
        $region26: #{tpu_custom_call.1} parent=11 // pred_check_branch
          %230 = sbr.rel (%p228) target = $region28
        $region27: #{tpu_custom_call.1} parent=11 // pred_region
          _
        $region28: #{tpu_custom_call.1} parent=11 // pred_fallthru
          _
        // Predicated region
        $region29: #{tpu_custom_call.1} parent=11 // pred_check
          %p231 = pneg %p149
        $region30: #{tpu_custom_call.1} parent=11 // pred_check_branch
          %233 = sbr.rel (%p231) target = $region32
        $region31: #{tpu_custom_call.1} parent=11 // pred_region
          %s235 = ssub.s32 64, 64
          %236 = vsyncadd [#allocation7], %s235
          %s238 = sshll.u32 [#allocation6], 4
          %s239 = int_to_ptr.vmem [resolvable:$true] %s238
          %241 = dma.hbm_to_vmem [thread:$0]  %s5, 64, %s239, [#allocation7]
        $region32: #{tpu_custom_call.1} parent=11 // pred_fallthru
          _
        // Predicated region
        $region33: #{tpu_custom_call.1} parent=11 // pred_check
          %p242 = pneg %p170
        $region34: #{tpu_custom_call.1} parent=11 // pred_check_branch
          %244 = sbr.rel (%p242) target = $region36
        $region35: #{tpu_custom_call.1} parent=11 // pred_region
          _
        $region36: #{tpu_custom_call.1} parent=11 // pred_fallthru
          _
      $region12: #{tpu_custom_call.1} parent=5 // pred_fallthru
        _
      %p245 = scmp.lt.s32.totalorder %s18, 2
      // Predicated region
      $region37: #{tpu_custom_call.1} parent=5 // pred_check
        %p246 = pneg %p245
      $region38: #{tpu_custom_call.1} parent=5 // pred_check_branch
        %248 = sbr.rel (%p246) target = $region40
      $region39: #{tpu_custom_call.1} parent=5 // pred_region
        // Predicated region
        $region41: #{tpu_custom_call.1} parent=39 // pred_check
          %p249 = pneg %p38
        $region42: #{tpu_custom_call.1} parent=39 // pred_check_branch
          %251 = sbr.rel (%p249) target = $region44
        $region43: #{tpu_custom_call.1} parent=39 // pred_region
          %p252 = scmp.lt.s32.totalorder %s18, 1
          %s253 = scalar_select %p252, %s18, 1
          %s254 = smul.addr %s253, 4
          %s255 = smul.addr %s254, 4
          %s256 = scalar_lea.vmem %s0, %s255
        $region44: #{tpu_custom_call.1} parent=39 // pred_fallthru
          _
      $region40: #{tpu_custom_call.1} parent=5 // pred_fallthru
        _
      %p257 = scmp.le.s32.totalorder 1, %s18
      %p258 = scmp.lt.s32.totalorder %s18, 3
      %p259 = pnand %p257, %p258
      %p260 = pneg %p259
      // Predicated region
      $region45: #{tpu_custom_call.1} parent=5 // pred_check
        _
      $region46: #{tpu_custom_call.1} parent=5 // pred_check_branch
        %262 = sbr.rel (%p259) target = $region48
      $region47: #{tpu_custom_call.1} parent=5 // pred_region
        %s263 = ssub.s32 %s18, 1
        // Predicated region
        $region49: #{tpu_custom_call.1} parent=47 // pred_check
          %p264 = pneg %p107
        $region50: #{tpu_custom_call.1} parent=47 // pred_check_branch
          %266 = sbr.rel (%p264) target = $region52
        $region51: #{tpu_custom_call.1} parent=47 // pred_region
          %267 = dma.done [#allocation4], 32
        $region52: #{tpu_custom_call.1} parent=47 // pred_fallthru
          _
        // Predicated region
        $region53: #{tpu_custom_call.1} parent=47 // pred_check
          %p268 = pneg %p149
        $region54: #{tpu_custom_call.1} parent=47 // pred_check_branch
          %270 = sbr.rel (%p268) target = $region56
        $region55: #{tpu_custom_call.1} parent=47 // pred_region
          %271 = dma.done [#allocation7], 64
        $region56: #{tpu_custom_call.1} parent=47 // pred_fallthru
          _
        %p272 = scmp.lt.s32.totalorder %s23, 1
        %s273 = scalar_select %p272, %s23, 1
        %s274 = smul.addr %s273, 4
        %s275 = smul.addr %s274, 4
        %s276 = scalar_lea.vmem %s0, %s275
        %p277 = pneg %p44
        %p278 = pneg %p41
        %p279 = pneg %p65
        %p280 = pneg %p62
        %p281 = pneg %p86
        %p282 = pneg %p83
        %p283 = pneg %p107
        %p284 = pneg %p104
        %p285 = pneg %p128
        %p286 = pneg %p125
        %p287 = pneg %p149
        %p288 = pneg %p146
        %p289 = pneg %p170
        %p290 = pneg %p167
        %p291 = pneg %p196
        %p292 = pneg %p193
        %s293 = sand.u32 %s183, 1
        %s294 = scalar_lea.sflag [#allocation5], %s293
        %s295 = sand.u32 %s183, 1
        %s296 = smul.addr %s295, 24
        %s297 = scalar_lea.vmem [#allocation8], %s296
        %p298 = scmp.lt.s32.totalorder %s23, 1
        %s299 = scalar_select %p298, %s23, 1
        %s300 = smul.addr %s299, 4
        %s301 = smul.addr %s300, 4
        %s302 = scalar_lea.vmem %s0, %s301
        %v304 = vld [vmem:[%s1] sm:$0xf]
        %v305 = vld [vmem:[%s1 + $0x4] sm:$0xf]
        %v306 = vld [vmem:[%s302] sm:$0xff]
        %v307 = vld [vmem:[%s302 + $0x8] sm:$0xff]
        %v308 = vld [vmem:[%s2] sm:$0xff]
        %v309 = vld [vmem:[%s2 + $0x8] sm:$0xff]
        %311 = vset.pattern.permute.xlu0 0
        %312 = vperm.xlu0 %311, %v308
        %v313 = vpop.permute.xlu0 %312
        %316 = vset.pattern.permute.xlu0 0
        %317 = vperm.xlu0 %316, %v309
        %v318 = vpop.permute.xlu0 %317
        %v322 = vunpack.c.l.b16 %v304
        %v323 = vunpack.c.l.b16 %v305
        %v324 = vpack.c.b16 %v323, %v322
        %v327 = vunpack.c.l.b16 %v306
        %v328 = vunpack.c.h.b16 %v306
        %v329 = vunpack.c.l.b16 %v307
        %v330 = vunpack.c.h.b16 %v307
        %v331 = vpack.c.b16 %v327, %v327
        %v332 = vpack.c.b16 %v328, %v328
        %v333 = vpack.c.b16 %v329, %v329
        %v334 = vpack.c.b16 %v330, %v330
        %vm335 = vcmask 64512
        %v337 = vsel %vm335, %v324, 0
        %vm339 = vcmask 1043456
        %v341 = vsel %vm339, %v331, 0
        %v344 = vsel %vm339, %v332, 0
        %v347 = vsel %vm339, %v333, 0
        %v350 = vsel %vm339, %v334, 0
        %352 = vmatprep.subr.bf16.mxu0 0
        %353 = vmatpush1.bf16.msra.mxu0 0
        %354 = vmatprep.subr.bf16.mxu0 0
        %355 = vmatpush1.bf16.msra.mxu0 0
        %356 = vmatprep.subr.bf16.mxu0 0
        %357 = vmatpush1.bf16.msra.mxu0 0
        %358 = vmatprep.subr.bf16.mxu0 0
        %359 = vmatpush1.bf16.msra.mxu0 0
        %360 = vmatprep.subr.bf16.mxu0 0
        %361 = vmatpush1.bf16.msra.mxu0 0
        %362 = vmatprep.subr.bf16.mxu0 0
        %363 = vmatpush1.bf16.msra.mxu0 0
        %364 = vmatprep.subr.bf16.mxu0 0
        %365 = vmatpush1.bf16.msra.mxu0 0
        %366 = vmatprep.subr.bf16.mxu0 %v344
        %367 = vmatpush1.bf16.msra.mxu0 %v341
        %368 = vmatprep.subr.bf16.mxu0 0
        %369 = vmatpush2.bf16.msra.mxu0 0
        %370 = vmatprep.subr.bf16.mxu0 0
        %371 = vmatpush2.bf16.msra.mxu0 0
        %372 = vmatprep.subr.bf16.mxu0 0
        %373 = vmatpush2.bf16.msra.mxu0 0
        %374 = vmatprep.subr.bf16.mxu0 0
        %375 = vmatpush2.bf16.msra.mxu0 0
        %376 = vmatprep.subr.bf16.mxu0 0
        %377 = vmatpush2.bf16.msra.mxu0 0
        %378 = vmatprep.subr.bf16.mxu0 0
        %379 = vmatpush2.bf16.msra.mxu0 0
        %380 = vmatprep.subr.bf16.mxu0 0
        %381 = vmatpush2.bf16.msra.mxu0 0
        %382 = vmatprep.subr.bf16.mxu0 0
        %383 = vmatpush2.bf16.msra.mxu0 0
        %384 = vmatprep.mubr.bf16.mxu0 0
        %385 = vmatmul.mubr.bf16.gmra.mxu0 %v337
        %v386 = vpop.f32.mrf.mxu0
        %v387 = vadd.f32 %v313, %v386
        %v388 = vpop.f32.mrf.mxu0
        %v389 = vadd.f32 %v313, %v388
        %v390 = vpop.f32.mrf.mxu0
        %v391 = vadd.f32 %v318, %v390
        %v392 = vpop.f32.mrf.mxu0
        %v393 = vadd.f32 %v318, %v392
        %394 = vdwg.mxu0
        %395 = vmatprep.subr.bf16.mxu0 0
        %396 = vmatpush1.bf16.msra.mxu0 0
        %397 = vmatprep.subr.bf16.mxu0 0
        %398 = vmatpush1.bf16.msra.mxu0 0
        %399 = vmatprep.subr.bf16.mxu0 0
        %400 = vmatpush1.bf16.msra.mxu0 0
        %401 = vmatprep.subr.bf16.mxu0 0
        %402 = vmatpush1.bf16.msra.mxu0 0
        %403 = vmatprep.subr.bf16.mxu0 0
        %404 = vmatpush1.bf16.msra.mxu0 0
        %405 = vmatprep.subr.bf16.mxu0 0
        %406 = vmatpush1.bf16.msra.mxu0 0
        %407 = vmatprep.subr.bf16.mxu0 0
        %408 = vmatpush1.bf16.msra.mxu0 0
        %409 = vmatprep.subr.bf16.mxu0 %v350
        %410 = vmatpush1.bf16.msra.mxu0 %v347
        %411 = vmatprep.subr.bf16.mxu0 0
        %412 = vmatpush2.bf16.msra.mxu0 0
        %413 = vmatprep.subr.bf16.mxu0 0
        %414 = vmatpush2.bf16.msra.mxu0 0
        %415 = vmatprep.subr.bf16.mxu0 0
        %416 = vmatpush2.bf16.msra.mxu0 0
        %417 = vmatprep.subr.bf16.mxu0 0
        %418 = vmatpush2.bf16.msra.mxu0 0
        %419 = vmatprep.subr.bf16.mxu0 0
        %420 = vmatpush2.bf16.msra.mxu0 0
        %421 = vmatprep.subr.bf16.mxu0 0
        %422 = vmatpush2.bf16.msra.mxu0 0
        %423 = vmatprep.subr.bf16.mxu0 0
        %424 = vmatpush2.bf16.msra.mxu0 0
        %425 = vmatprep.subr.bf16.mxu0 0
        %426 = vmatpush2.bf16.msra.mxu0 0
        %427 = vmatprep.mubr.bf16.mxu0 0
        %428 = vmatmul.mubr.bf16.gmra.mxu0 %v337
        %v429 = vpop.f32.mrf.mxu0
        %v430 = vadd.f32 %v313, %v429
        %v431 = vpop.f32.mrf.mxu0
        %v432 = vadd.f32 %v313, %v431
        %v433 = vpop.f32.mrf.mxu0
        %v434 = vadd.f32 %v318, %v433
        %v435 = vpop.f32.mrf.mxu0
        %v436 = vadd.f32 %v318, %v435
        %437 = vdwg.mxu0
        %vm438 = vcmp.gt.f32.partialorder %v387, 0.0
        %vm439 = vcmp.gt.f32.partialorder %v389, 0.0
        %vm440 = vcmp.gt.f32.partialorder %v430, 0.0
        %vm441 = vcmp.gt.f32.partialorder %v432, 0.0
        %vm442 = vcmp.gt.f32.partialorder %v391, 0.0
        %vm443 = vcmp.gt.f32.partialorder %v393, 0.0
        %vm444 = vcmp.gt.f32.partialorder %v434, 0.0
        %vm445 = vcmp.gt.f32.partialorder %v436, 0.0
        %v446 = vmul.f32 %v387, 0.01
        %v447 = vmul.f32 %v389, 0.01
        %v448 = vmul.f32 %v430, 0.01
        %v449 = vmul.f32 %v432, 0.01
        %v450 = vmul.f32 %v391, 0.01
        %v451 = vmul.f32 %v393, 0.01
        %v452 = vmul.f32 %v434, 0.01
        %v453 = vmul.f32 %v436, 0.01
        %v454 = vsel %vm438, %v387, %v446
        %v455 = vsel %vm439, %v389, %v447
        %v456 = vsel %vm440, %v430, %v448
        %v457 = vsel %vm441, %v432, %v449
        %v458 = vsel %vm442, %v391, %v450
        %v459 = vsel %vm443, %v393, %v451
        %v460 = vsel %vm444, %v434, %v452
        %v461 = vsel %vm445, %v436, %v453
        %vm462 = vcmp.gt.f32.partialorder %v308, 0.0
        %vm463 = vcmp.gt.f32.partialorder %v309, 0.0
        %v464 = vmul.f32 %v308, 0.01
        %v465 = vmul.f32 %v309, 0.01
        %v466 = vsel %vm462, %v308, %v464
        %v467 = vsel %vm463, %v309, %v465
        %v468 = vadd.f32 %v454, %v455
        %v469 = vadd.f32 %v468, %v456
        %vm470 = vcmask 392192
        %v471 = vsel %vm470, %v457, 0.0
        %v472 = vadd.f32 %v469, %v471
        %473 = vadd.xlane.f32.xlu0 %v472
        %v474 = vpop.xlane.xlu0 %473
        %v475 = vadd.f32 %v458, %v459
        %v476 = vadd.f32 %v475, %v460
        %v477 = vsel %vm470, %v461, 0.0
        %v478 = vadd.f32 %v476, %v477
        %479 = vadd.xlane.f32.xlu0 %v478
        %v480 = vpop.xlane.xlu0 %479
        %v481 = vmul.f32 %v466, 176.0
        %v482 = vmul.f32 %v467, 176.0
        %v483 = vsub.f32 %v474, %v481
        %v484 = vsub.f32 %v480, %v482
        %v485 = vmul.f32 %v454, %v454
        %v486 = vmul.f32 %v455, %v455
        %v487 = vmul.f32 %v456, %v456
        %v488 = vmul.f32 %v457, %v457
        %v489 = vmul.f32 %v458, %v458
        %v490 = vmul.f32 %v459, %v459
        %v491 = vmul.f32 %v460, %v460
        %v492 = vmul.f32 %v461, %v461
        %v493 = vadd.f32 %v485, %v486
        %v494 = vadd.f32 %v493, %v487
        %v495 = vsel %vm470, %v488, 0.0
        %v496 = vadd.f32 %v494, %v495
        %497 = vadd.xlane.f32.xlu0 %v496
        %v498 = vpop.xlane.xlu0 %497
        %v499 = vadd.f32 %v489, %v490
        %v500 = vadd.f32 %v499, %v491
        %v501 = vsel %vm470, %v492, 0.0
        %v502 = vadd.f32 %v500, %v501
        %503 = vadd.xlane.f32.xlu0 %v502
        %v504 = vpop.xlane.xlu0 %503
        %v505 = vmul.f32 %v466, %v466
        %v506 = vmul.f32 %v467, %v467
        %v507 = vmul.f32 %v505, 176.0
        %v508 = vmul.f32 %v506, 176.0
        %v509 = vsub.f32 %v498, %v507
        %v510 = vsub.f32 %v504, %v508
        %v512 = vrot.slane %v483, 4
        %v514 = vadd.f32 %v483, %v512
        %v515 = vadd.f32 %v514, %v484
        %v517 = vrot.slane %v484, 4
        %v519 = vadd.f32 %v515, %v517
        %v521 = vrot.slane %v509, 4
        %v523 = vadd.f32 %v509, %v521
        %v524 = vadd.f32 %v523, %v510
        %v526 = vrot.slane %v510, 4
        %v528 = vadd.f32 %v524, %v526
        %v529 = vrcp.pop 1024.0
        %v530 = vmul.f32 %v519, %v529
        %v531 = vmul.f32 %v528, %v529
        %v532 = vmul.f32 %v530, %v530
        %v533 = vsub.f32 %v531, %v532
        %v534 = vmax.f32 %v533, 0.0
        %v535 = vadd.f32 %v534, 1e-05
        %v536 = vrsqrt.pop %v535
        %v538 = vrot.slane %v530, 4
        %v540 = vsel %vm339, %v530, %v538
        %v542 = vrot.slane %v536, 4
        %v544 = vsel %vm339, %v536, %v542
        %546 = vset.pattern.permute.xlu0 0
        %547 = vperm.xlu0 %546, %v540
        %v548 = vpop.permute.xlu0 %547
        %v550 = vsub.f32 %v454, %v548
        %v551 = vsub.f32 %v455, %v548
        %v552 = vsub.f32 %v456, %v548
        %v553 = vsub.f32 %v457, %v548
        %v554 = vsub.f32 %v458, %v548
        %v555 = vsub.f32 %v459, %v548
        %v556 = vsub.f32 %v460, %v548
        %v557 = vsub.f32 %v461, %v548
        %559 = vset.pattern.permute.xlu0 0
        %560 = vperm.xlu0 %559, %v544
        %v561 = vpop.permute.xlu0 %560
        %v563 = vmul.f32 %v550, %v561
        %v564 = vmul.f32 %v551, %v561
        %v565 = vmul.f32 %v552, %v561
        %v566 = vmul.f32 %v553, %v561
        %v567 = vmul.f32 %v554, %v561
        %v568 = vmul.f32 %v555, %v561
        %v569 = vmul.f32 %v556, %v561
        %v570 = vmul.f32 %v557, %v561
        %v571 = vld [vmem:[#allocation6] sm:$0xf]
        %v573 = vlaneseq
        %v574 = vshrl.u32 %v573, 7
        %v575 = vsub.s32 0, %v574
        %v576 = vrot.slane %v571, %v575
        %v577 = vlaneseq
        %v578 = vshrl.u32 %v577, 7
        %v579 = vsub.s32 1, %v578
        %v580 = vrot.slane %v571, %v579
        %v581 = vlaneseq
        %v582 = vshrl.u32 %v581, 7
        %v583 = vsub.s32 2, %v582
        %v584 = vrot.slane %v571, %v583
        %v585 = vlaneseq
        %v586 = vshrl.u32 %v585, 7
        %v587 = vsub.s32 3, %v586
        %v588 = vrot.slane %v571, %v587
        %v593 = vmul.f32 %v563, %v576
        %v594 = vmul.f32 %v564, %v580
        %v595 = vmul.f32 %v565, %v584
        %v596 = vmul.f32 %v566, %v588
        %v597 = vmul.f32 %v567, %v576
        %v598 = vmul.f32 %v568, %v580
        %v599 = vmul.f32 %v569, %v584
        %v600 = vmul.f32 %v570, %v588
        %v601 = vpack.c.bf16 %v597, %v593
        %v602 = vpack.c.bf16 %v598, %v594
        %v603 = vpack.c.bf16 %v599, %v595
        %v604 = vpack.c.bf16 %v600, %v596
        %v609 = vunpack.c.l.b16 %v601
        %v610 = vunpack.c.l.b16 %v602
        %v611 = vunpack.c.l.b16 %v603
        %v612 = vunpack.c.l.b16 %v604
        %v613 = vunpack.c.h.b16 %v601
        %v614 = vunpack.c.h.b16 %v602
        %v615 = vunpack.c.h.b16 %v603
        %v616 = vunpack.c.h.b16 %v604
        %v617 = vpack.c.b16 %v610, %v609
        %v618 = vpack.c.b16 %v612, %v611
        %v619 = vpack.c.b16 %v614, %v613
        %v620 = vpack.c.b16 %v616, %v615
        %625 = vst [vmem:[#allocation2] sm:$0xff] %v617
        %vm626 = vcmask 392196
        %vm627 = vmor %vm626, %vm339
        %628 = vst.msk [vmem:[#allocation2 + $0x8] sm:$0xff] %vm627, %v618
        %629 = vst [vmem:[#allocation2 + $0x10] sm:$0xff] %v619
        %630 = vst.msk [vmem:[#allocation2 + $0x18] sm:$0xff] %vm627, %v620
        %vm631 = vcmask 404864
        %632 = vst.msk [vmem:[#allocation2 + $0xc] sm:$0xf] %vm631, 0
        %633 = vst.msk [vmem:[#allocation2 + $0x1c] sm:$0xf] %vm631, 0
        %v634 = vld [vmem:[#allocation2 + $0x10] sm:$0xcc]
        %v635 = vld [vmem:[#allocation2 + $0x18] sm:$0xc]
        %v636 = vld [vmem:[#allocation2 + $0x10] sm:$0x33]
        %v637 = vld [vmem:[#allocation2 + $0x18] sm:$0x33]
        %v638 = vld [vmem:[#allocation2] sm:$0xcc]
        %v639 = vld [vmem:[#allocation2 + $0x8] sm:$0xcc]
        %v640 = vld [vmem:[#allocation2] sm:$0x33]
        %v641 = vld [vmem:[#allocation2 + $0x8] sm:$0x33]
        %v644 = vunpack.c.l.b16 %v634
        %v645 = vunpack.c.h.b16 %v634
        %v646 = vunpack.c.l.b16 %v635
        %v647 = vpack.c.b16 %v644, %v644
        %v648 = vpack.c.b16 %v645, %v645
        %v649 = vpack.c.b16 %v646, %v646
        %v652 = vunpack.c.l.b16 %v636
        %v653 = vunpack.c.h.b16 %v636
        %v654 = vunpack.c.l.b16 %v637
        %v655 = vunpack.c.h.b16 %v637
        %v656 = vpack.c.b16 %v652, %v652
        %v657 = vpack.c.b16 %v653, %v653
        %v658 = vpack.c.b16 %v654, %v654
        %v659 = vpack.c.b16 %v655, %v655
        %v660 = vrot.slane %v656, 6
        %v661 = vrot.slane %v657, 6
        %v662 = vrot.slane %v658, 6
        %v663 = vrot.slane %v659, 6
        %664 = vrot.lane.b32.xlu0 %v660, 127
        %v665 = vpop.permute.xlu0 %664
        %666 = vrot.lane.b32.xlu0 %v661, 127
        %v667 = vpop.permute.xlu0 %666
        %668 = vrot.lane.b32.xlu0 %v662, 127
        %v669 = vpop.permute.xlu0 %668
        %670 = vrot.lane.b32.xlu0 %v663, 127
        %v671 = vpop.permute.xlu0 %670
        %vm672 = vcmask 1039360
        %v673 = vsel %vm672, %v665, %v667
        %v674 = vsel %vm672, %v667, %v669
        %v675 = vsel %vm672, %v669, %v671
        %v678 = vunpack.c.l.b16 %v638
        %v679 = vunpack.c.h.b16 %v638
        %v680 = vunpack.c.l.b16 %v639
        %v681 = vunpack.c.h.b16 %v639
        %v682 = vpack.c.b16 %v678, %v678
        %v683 = vpack.c.b16 %v679, %v679
        %v684 = vpack.c.b16 %v680, %v680
        %v685 = vpack.c.b16 %v681, %v681
        %686 = vrot.lane.b32.xlu0 %v682, 104
        %v687 = vpop.permute.xlu0 %686
        %688 = vrot.lane.b32.xlu0 %v683, 104
        %v689 = vpop.permute.xlu0 %688
        %690 = vrot.lane.b32.xlu0 %v684, 104
        %v691 = vpop.permute.xlu0 %690
        %692 = vrot.lane.b32.xlu0 %v685, 104
        %v693 = vpop.permute.xlu0 %692
        %vm694 = vcmask 850944
        %v695 = vsel %vm694, %v687, %v689
        %v696 = vsel %vm694, %v689, %v691
        %v697 = vsel %vm694, %v691, %v693
        %v700 = vunpack.c.l.b16 %v640
        %v701 = vunpack.c.h.b16 %v640
        %v702 = vunpack.c.l.b16 %v641
        %v703 = vunpack.c.h.b16 %v641
        %v704 = vpack.c.b16 %v700, %v700
        %v705 = vpack.c.b16 %v701, %v701
        %v706 = vpack.c.b16 %v702, %v702
        %v707 = vpack.c.b16 %v703, %v703
        %v708 = vrot.slane %v704, 6
        %v709 = vrot.slane %v705, 6
        %v710 = vrot.slane %v706, 6
        %v711 = vrot.slane %v707, 6
        %712 = vrot.lane.b32.xlu0 %v708, 103
        %v713 = vpop.permute.xlu0 %712
        %714 = vrot.lane.b32.xlu0 %v709, 103
        %v715 = vpop.permute.xlu0 %714
        %716 = vrot.lane.b32.xlu0 %v710, 103
        %v717 = vpop.permute.xlu0 %716
        %718 = vrot.lane.b32.xlu0 %v711, 103
        %v719 = vpop.permute.xlu0 %718
        %vm720 = vcmask 842752
        %v721 = vsel %vm720, %v713, %v715
        %v722 = vsel %vm720, %v715, %v717
        %v723 = vsel %vm720, %v717, %v719
        %v724 = vld [vmem:[#allocation2 + $0x18] sm:$0xcc]
        %725 = vrot.lane.b32.xlu0 %v656, 127
        %v726 = vpop.permute.xlu0 %725
        %727 = vrot.lane.b32.xlu0 %v657, 127
        %v728 = vpop.permute.xlu0 %727
        %729 = vrot.lane.b32.xlu0 %v658, 127
        %v730 = vpop.permute.xlu0 %729
        %731 = vrot.lane.b32.xlu0 %v659, 127
        %v732 = vpop.permute.xlu0 %731
        %v733 = vsel %vm672, %v726, %v728
        %v734 = vsel %vm672, %v728, %v730
        %v735 = vsel %vm672, %v730, %v732
        %v737 = vunpack.c.l.b16 %v724
        %v738 = vunpack.c.h.b16 %v724
        %v739 = vpack.c.b16 %v737, %v737
        %v740 = vpack.c.b16 %v738, %v738
        %v741 = vrot.slane %v647, 2
        %v742 = vrot.slane %v648, 2
        %v743 = vrot.slane %v739, 2
        %v744 = vrot.slane %v740, 2
        %745 = vrot.lane.b32.xlu0 %v741, 127
        %v746 = vpop.permute.xlu0 %745
        %747 = vrot.lane.b32.xlu0 %v742, 127
        %v748 = vpop.permute.xlu0 %747
        %749 = vrot.lane.b32.xlu0 %v743, 127
        %v750 = vpop.permute.xlu0 %749
        %751 = vrot.lane.b32.xlu0 %v744, 127
        %v752 = vpop.permute.xlu0 %751
        %v753 = vsel %vm672, %v746, %v748
        %v754 = vsel %vm672, %v748, %v750
        %v755 = vsel %vm672, %v750, %v752
        %756 = vrot.lane.b32.xlu0 %v704, 103
        %v757 = vpop.permute.xlu0 %756
        %758 = vrot.lane.b32.xlu0 %v705, 103
        %v759 = vpop.permute.xlu0 %758
        %760 = vrot.lane.b32.xlu0 %v706, 103
        %v761 = vpop.permute.xlu0 %760
        %762 = vrot.lane.b32.xlu0 %v707, 103
        %v763 = vpop.permute.xlu0 %762
        %v764 = vsel %vm720, %v757, %v759
        %v765 = vsel %vm720, %v759, %v761
        %v766 = vsel %vm720, %v761, %v763
        %v767 = vrot.slane %v682, 2
        %v768 = vrot.slane %v683, 2
        %v769 = vrot.slane %v684, 2
        %v770 = vrot.slane %v685, 2
        %771 = vrot.lane.b32.xlu0 %v767, 103
        %v772 = vpop.permute.xlu0 %771
        %773 = vrot.lane.b32.xlu0 %v768, 103
        %v774 = vpop.permute.xlu0 %773
        %775 = vrot.lane.b32.xlu0 %v769, 103
        %v776 = vpop.permute.xlu0 %775
        %777 = vrot.lane.b32.xlu0 %v770, 103
        %v778 = vpop.permute.xlu0 %777
        %v779 = vsel %vm720, %v772, %v774
        %v780 = vsel %vm720, %v774, %v776
        %v781 = vsel %vm720, %v776, %v778
        %782 = vrot.lane.b32.xlu0 %v647, 127
        %v783 = vpop.permute.xlu0 %782
        %784 = vrot.lane.b32.xlu0 %v648, 127
        %v785 = vpop.permute.xlu0 %784
        %786 = vrot.lane.b32.xlu0 %v739, 127
        %v787 = vpop.permute.xlu0 %786
        %788 = vrot.lane.b32.xlu0 %v740, 127
        %v789 = vpop.permute.xlu0 %788
        %v790 = vsel %vm672, %v783, %v785
        %v791 = vsel %vm672, %v785, %v787
        %v792 = vsel %vm672, %v787, %v789
        %793 = vrot.lane.b32.xlu0 %v660, 126
        %v794 = vpop.permute.xlu0 %793
        %795 = vrot.lane.b32.xlu0 %v661, 126
        %v796 = vpop.permute.xlu0 %795
        %797 = vrot.lane.b32.xlu0 %v662, 126
        %v798 = vpop.permute.xlu0 %797
        %799 = vrot.lane.b32.xlu0 %v663, 126
        %v800 = vpop.permute.xlu0 %799
        %vm801 = vcmask 1031168
        %v802 = vsel %vm801, %v794, %v796
        %v803 = vsel %vm801, %v796, %v798
        %v804 = vsel %vm801, %v798, %v800
        %805 = vrot.lane.b32.xlu0 %v682, 103
        %v806 = vpop.permute.xlu0 %805
        %807 = vrot.lane.b32.xlu0 %v683, 103
        %v808 = vpop.permute.xlu0 %807
        %809 = vrot.lane.b32.xlu0 %v684, 103
        %v810 = vpop.permute.xlu0 %809
        %811 = vrot.lane.b32.xlu0 %v685, 103
        %v812 = vpop.permute.xlu0 %811
        %v813 = vsel %vm720, %v806, %v808
        %v814 = vsel %vm720, %v808, %v810
        %v815 = vsel %vm720, %v810, %v812
        %816 = vrot.lane.b32.xlu0 %v708, 102
        %v817 = vpop.permute.xlu0 %816
        %818 = vrot.lane.b32.xlu0 %v709, 102
        %v819 = vpop.permute.xlu0 %818
        %820 = vrot.lane.b32.xlu0 %v710, 102
        %v821 = vpop.permute.xlu0 %820
        %822 = vrot.lane.b32.xlu0 %v711, 102
        %v823 = vpop.permute.xlu0 %822
        %vm824 = vcmask 834560
        %v825 = vsel %vm824, %v817, %v819
        %v826 = vsel %vm824, %v819, %v821
        %v827 = vsel %vm824, %v821, %v823
        %828 = vrot.lane.b32.xlu0 %v647, 104
        %v829 = vpop.permute.xlu0 %828
        %830 = vrot.lane.b32.xlu0 %v648, 104
        %v831 = vpop.permute.xlu0 %830
        %832 = vrot.lane.b32.xlu0 %v739, 104
        %v833 = vpop.permute.xlu0 %832
        %834 = vrot.lane.b32.xlu0 %v740, 104
        %v835 = vpop.permute.xlu0 %834
        %v836 = vsel %vm694, %v829, %v831
        %v837 = vsel %vm694, %v831, %v833
        %v838 = vsel %vm694, %v833, %v835
        %839 = vrot.lane.b32.xlu0 %v660, 103
        %v840 = vpop.permute.xlu0 %839
        %841 = vrot.lane.b32.xlu0 %v661, 103
        %v842 = vpop.permute.xlu0 %841
        %843 = vrot.lane.b32.xlu0 %v662, 103
        %v844 = vpop.permute.xlu0 %843
        %845 = vrot.lane.b32.xlu0 %v663, 103
        %v846 = vpop.permute.xlu0 %845
        %v847 = vsel %vm720, %v840, %v842
        %v848 = vsel %vm720, %v842, %v844
        %v849 = vsel %vm720, %v844, %v846
        %850 = vrot.lane.b32.xlu0 %v656, 103
        %v851 = vpop.permute.xlu0 %850
        %852 = vrot.lane.b32.xlu0 %v657, 103
        %v853 = vpop.permute.xlu0 %852
        %854 = vrot.lane.b32.xlu0 %v658, 103
        %v855 = vpop.permute.xlu0 %854
        %856 = vrot.lane.b32.xlu0 %v659, 103
        %v857 = vpop.permute.xlu0 %856
        %v858 = vsel %vm720, %v851, %v853
        %v859 = vsel %vm720, %v853, %v855
        %v860 = vsel %vm720, %v855, %v857
        %861 = vrot.lane.b32.xlu0 %v741, 103
        %v862 = vpop.permute.xlu0 %861
        %863 = vrot.lane.b32.xlu0 %v742, 103
        %v864 = vpop.permute.xlu0 %863
        %865 = vrot.lane.b32.xlu0 %v743, 103
        %v866 = vpop.permute.xlu0 %865
        %867 = vrot.lane.b32.xlu0 %v744, 103
        %v868 = vpop.permute.xlu0 %867
        %v869 = vsel %vm720, %v862, %v864
        %v870 = vsel %vm720, %v864, %v866
        %v871 = vsel %vm720, %v866, %v868
        %872 = vrot.lane.b32.xlu0 %v647, 103
        %v873 = vpop.permute.xlu0 %872
        %874 = vrot.lane.b32.xlu0 %v648, 103
        %v875 = vpop.permute.xlu0 %874
        %876 = vrot.lane.b32.xlu0 %v739, 103
        %v877 = vpop.permute.xlu0 %876
        %878 = vrot.lane.b32.xlu0 %v740, 103
        %v879 = vpop.permute.xlu0 %878
        %v880 = vsel %vm720, %v873, %v875
        %v881 = vsel %vm720, %v875, %v877
        %v882 = vsel %vm720, %v877, %v879
        %883 = vrot.lane.b32.xlu0 %v660, 102
        %v884 = vpop.permute.xlu0 %883
        %885 = vrot.lane.b32.xlu0 %v661, 102
        %v886 = vpop.permute.xlu0 %885
        %887 = vrot.lane.b32.xlu0 %v662, 102
        %v888 = vpop.permute.xlu0 %887
        %889 = vrot.lane.b32.xlu0 %v663, 102
        %v890 = vpop.permute.xlu0 %889
        %v891 = vsel %vm824, %v884, %v886
        %v892 = vsel %vm824, %v886, %v888
        %v893 = vsel %vm824, %v888, %v890
        %894 = vrot.lane.b32.xlu0 %v682, 80
        %v895 = vpop.permute.xlu0 %894
        %896 = vrot.lane.b32.xlu0 %v683, 80
        %v897 = vpop.permute.xlu0 %896
        %898 = vrot.lane.b32.xlu0 %v684, 80
        %v899 = vpop.permute.xlu0 %898
        %900 = vrot.lane.b32.xlu0 %v685, 80
        %v901 = vpop.permute.xlu0 %900
        %vm902 = vcmask 654336
        %v903 = vsel %vm902, %v895, %v897
        %v904 = vsel %vm902, %v897, %v899
        %v905 = vsel %vm902, %v899, %v901
        %906 = vrot.lane.b32.xlu0 %v708, 79
        %v907 = vpop.permute.xlu0 %906
        %908 = vrot.lane.b32.xlu0 %v709, 79
        %v909 = vpop.permute.xlu0 %908
        %910 = vrot.lane.b32.xlu0 %v710, 79
        %v911 = vpop.permute.xlu0 %910
        %912 = vrot.lane.b32.xlu0 %v711, 79
        %v913 = vpop.permute.xlu0 %912
        %vm914 = vcmask 646144
        %v915 = vsel %vm914, %v907, %v909
        %v916 = vsel %vm914, %v909, %v911
        %v917 = vsel %vm914, %v911, %v913
        %918 = vrot.lane.b32.xlu0 %v704, 79
        %v919 = vpop.permute.xlu0 %918
        %920 = vrot.lane.b32.xlu0 %v705, 79
        %v921 = vpop.permute.xlu0 %920
        %922 = vrot.lane.b32.xlu0 %v706, 79
        %v923 = vpop.permute.xlu0 %922
        %924 = vrot.lane.b32.xlu0 %v707, 79
        %v925 = vpop.permute.xlu0 %924
        %v926 = vsel %vm914, %v919, %v921
        %v927 = vsel %vm914, %v921, %v923
        %v928 = vsel %vm914, %v923, %v925
        %929 = vrot.lane.b32.xlu0 %v767, 79
        %v930 = vpop.permute.xlu0 %929
        %931 = vrot.lane.b32.xlu0 %v768, 79
        %v932 = vpop.permute.xlu0 %931
        %933 = vrot.lane.b32.xlu0 %v769, 79
        %v934 = vpop.permute.xlu0 %933
        %935 = vrot.lane.b32.xlu0 %v770, 79
        %v936 = vpop.permute.xlu0 %935
        %v937 = vsel %vm914, %v930, %v932
        %v938 = vsel %vm914, %v932, %v934
        %v939 = vsel %vm914, %v934, %v936
        %940 = vrot.lane.b32.xlu0 %v682, 79
        %v941 = vpop.permute.xlu0 %940
        %942 = vrot.lane.b32.xlu0 %v683, 79
        %v943 = vpop.permute.xlu0 %942
        %944 = vrot.lane.b32.xlu0 %v684, 79
        %v945 = vpop.permute.xlu0 %944
        %946 = vrot.lane.b32.xlu0 %v685, 79
        %v947 = vpop.permute.xlu0 %946
        %v948 = vsel %vm914, %v941, %v943
        %v949 = vsel %vm914, %v943, %v945
        %v950 = vsel %vm914, %v945, %v947
        %951 = vrot.lane.b32.xlu0 %v708, 78
        %v952 = vpop.permute.xlu0 %951
        %953 = vrot.lane.b32.xlu0 %v709, 78
        %v954 = vpop.permute.xlu0 %953
        %955 = vrot.lane.b32.xlu0 %v710, 78
        %v956 = vpop.permute.xlu0 %955
        %957 = vrot.lane.b32.xlu0 %v711, 78
        %v958 = vpop.permute.xlu0 %957
        %vm959 = vcmask 637952
        %v960 = vsel %vm959, %v952, %v954
        %v961 = vsel %vm959, %v954, %v956
        %v962 = vsel %vm959, %v956, %v958
        %v963 = vrot.slane %v649, 2
        %v964 = vrot.slane %v673, 2
        %v965 = vrot.slane %v674, 2
        %v966 = vrot.slane %v675, 2
        %v967 = vrot.slane %v695, 2
        %v968 = vrot.slane %v696, 2
        %v969 = vrot.slane %v697, 2
        %v970 = vrot.slane %v721, 2
        %v971 = vrot.slane %v722, 2
        %v972 = vrot.slane %v723, 2
        %v973 = vrot.slane %v733, 6
        %v974 = vrot.slane %v734, 6
        %v975 = vrot.slane %v735, 6
        %v976 = vrot.slane %v753, 6
        %v977 = vrot.slane %v754, 6
        %v978 = vrot.slane %v755, 6
        %v979 = vrot.slane %v764, 6
        %v980 = vrot.slane %v765, 6
        %v981 = vrot.slane %v766, 6
        %v982 = vrot.slane %v779, 6
        %v983 = vrot.slane %v780, 6
        %v984 = vrot.slane %v781, 6
        %v985 = vrot.slane %v790, 6
        %v986 = vrot.slane %v791, 6
        %v987 = vrot.slane %v792, 6
        %v988 = vrot.slane %v802, 6
        %v989 = vrot.slane %v803, 6
        %v990 = vrot.slane %v804, 6
        %v991 = vrot.slane %v813, 6
        %v992 = vrot.slane %v814, 6
        %v993 = vrot.slane %v815, 6
        %v994 = vrot.slane %v825, 6
        %v995 = vrot.slane %v826, 6
        %v996 = vrot.slane %v827, 6
        %v997 = vrot.slane %v695, 4
        %v998 = vrot.slane %v696, 4
        %v999 = vrot.slane %v697, 4
        %v1000 = vrot.slane %v721, 4
        %v1001 = vrot.slane %v722, 4
        %v1002 = vrot.slane %v723, 4
        %v1003 = vrot.slane %v836, 4
        %v1004 = vrot.slane %v837, 4
        %v1005 = vrot.slane %v838, 4
        %v1006 = vrot.slane %v847, 4
        %v1007 = vrot.slane %v848, 4
        %v1008 = vrot.slane %v849, 4
        %v1009 = vrot.slane %v836, 6
        %v1010 = vrot.slane %v837, 6
        %v1011 = vrot.slane %v838, 6
        %v1012 = vrot.slane %v847, 6
        %v1013 = vrot.slane %v848, 6
        %v1014 = vrot.slane %v849, 6
        %v1015 = vrot.slane %v903, 6
        %v1016 = vrot.slane %v904, 6
        %v1017 = vrot.slane %v905, 6
        %v1018 = vrot.slane %v915, 6
        %v1019 = vrot.slane %v916, 6
        %v1020 = vrot.slane %v917, 6
        %v1021 = vrot.slane %v858, 2
        %v1022 = vrot.slane %v859, 2
        %v1023 = vrot.slane %v860, 2
        %v1024 = vrot.slane %v869, 2
        %v1025 = vrot.slane %v870, 2
        %v1026 = vrot.slane %v871, 2
        %v1027 = vrot.slane %v926, 2
        %v1028 = vrot.slane %v927, 2
        %v1029 = vrot.slane %v928, 2
        %v1030 = vrot.slane %v937, 2
        %v1031 = vrot.slane %v938, 2
        %v1032 = vrot.slane %v939, 2
        %v1033 = vrot.slane %v880, 2
        %v1034 = vrot.slane %v881, 2
        %v1035 = vrot.slane %v882, 2
        %v1036 = vrot.slane %v891, 2
        %v1037 = vrot.slane %v892, 2
        %v1038 = vrot.slane %v893, 2
        %v1039 = vrot.slane %v948, 2
        %v1040 = vrot.slane %v949, 2
        %v1041 = vrot.slane %v950, 2
        %v1042 = vrot.slane %v960, 2
        %v1043 = vrot.slane %v961, 2
        %v1044 = vrot.slane %v962, 2
        %vm1045 = vcmask 1041408
        %v1048 = vsel %vm1045, %v741, %v973
        %v1051 = vsel %vm1045, %v742, %v974
        %v1054 = vsel %vm1045, %v963, %v975
        %v1057 = vsel %vm1045, %v964, %v976
        %v1060 = vsel %vm1045, %v965, %v977
        %v1063 = vsel %vm1045, %v966, %v978
        %v1066 = vsel %vm1045, %v967, %v979
        %v1069 = vsel %vm1045, %v968, %v980
        %v1072 = vsel %vm1045, %v969, %v981
        %v1075 = vsel %vm1045, %v970, %v982
        %v1078 = vsel %vm1045, %v971, %v983
        %v1081 = vsel %vm1045, %v972, %v984
        %v1083 = vsel %vm339, %v1048, %v985
        %v1085 = vsel %vm339, %v1051, %v986
        %v1087 = vsel %vm339, %v1054, %v987
        %v1089 = vsel %vm339, %v1057, %v988
        %v1091 = vsel %vm339, %v1060, %v989
        %v1093 = vsel %vm339, %v1063, %v990
        %v1095 = vsel %vm339, %v1066, %v991
        %v1097 = vsel %vm339, %v1069, %v992
        %v1099 = vsel %vm339, %v1072, %v993
        %v1101 = vsel %vm339, %v1075, %v994
        %v1103 = vsel %vm339, %v1078, %v995
        %v1105 = vsel %vm339, %v1081, %v996
        %vm1106 = vcmask 1045504
        %v1108 = vsel %vm1106, %v1083, %v997
        %v1111 = vsel %vm1106, %v1085, %v998
        %v1114 = vsel %vm1106, %v1087, %v999
        %v1117 = vsel %vm1106, %v1089, %v1000
        %v1120 = vsel %vm1106, %v1091, %v1001
        %v1123 = vsel %vm1106, %v1093, %v1002
        %v1126 = vsel %vm1106, %v1095, %v1003
        %v1129 = vsel %vm1106, %v1097, %v1004
        %v1132 = vsel %vm1106, %v1099, %v1005
        %v1135 = vsel %vm1106, %v1101, %v1006
        %v1138 = vsel %vm1106, %v1103, %v1007
        %v1141 = vsel %vm1106, %v1105, %v1008
        %v1145 = vsel %vm1045, %v764, %v813
        %v1148 = vsel %vm1045, %v765, %v814
        %v1151 = vsel %vm1045, %v766, %v815
        %v1154 = vsel %vm1045, %v779, %v825
        %v1157 = vsel %vm1045, %v780, %v826
        %v1160 = vsel %vm1045, %v781, %v827
        %v1163 = vsel %vm1045, %v858, %v880
        %v1166 = vsel %vm1045, %v859, %v881
        %v1169 = vsel %vm1045, %v860, %v882
        %v1172 = vsel %vm1045, %v869, %v891
        %v1175 = vsel %vm1045, %v870, %v892
        %v1178 = vsel %vm1045, %v871, %v893
        %v1180 = vsel %vm339, %v1145, %v1009
        %v1182 = vsel %vm339, %v1148, %v1010
        %v1184 = vsel %vm339, %v1151, %v1011
        %v1186 = vsel %vm339, %v1154, %v1012
        %v1188 = vsel %vm339, %v1157, %v1013
        %v1190 = vsel %vm339, %v1160, %v1014
        %v1192 = vsel %vm339, %v1163, %v1015
        %v1194 = vsel %vm339, %v1166, %v1016
        %v1196 = vsel %vm339, %v1169, %v1017
        %v1198 = vsel %vm339, %v1172, %v1018
        %v1200 = vsel %vm339, %v1175, %v1019
        %v1202 = vsel %vm339, %v1178, %v1020
        %v1204 = vsel %vm1106, %v1180, %v1021
        %v1207 = vsel %vm1106, %v1182, %v1022
        %v1210 = vsel %vm1106, %v1184, %v1023
        %v1213 = vsel %vm1106, %v1186, %v1024
        %v1216 = vsel %vm1106, %v1188, %v1025
        %v1219 = vsel %vm1106, %v1190, %v1026
        %v1222 = vsel %vm1106, %v1192, %v1027
        %v1225 = vsel %vm1106, %v1194, %v1028
        %v1228 = vsel %vm1106, %v1196, %v1029
        %v1231 = vsel %vm1106, %v1198, %v1030
        %v1234 = vsel %vm1106, %v1200, %v1031
        %v1237 = vsel %vm1106, %v1202, %v1032
        %v1239 = vld [vmem:[#allocation3] sm:$0x3]
        %v1240 = vld [vmem:[%s4] sm:$0xf]
        %1242 = vset.pattern.permute.xlu0 0
        %1243 = vperm.xlu0 %1242, %v1240
        %v1244 = vpop.permute.xlu0 %1243
        %vm1246 = vcmask 293888
        %v1248 = vsel %vm1246, %v1239, 0
        %v1251 = vsel %vm1045, %v1033, 0
        %v1254 = vsel %vm1045, %v1034, 0
        %v1257 = vsel %vm1045, %v1035, 0
        %v1260 = vsel %vm1045, %v1036, 0
        %v1263 = vsel %vm1045, %v1037, 0
        %v1266 = vsel %vm1045, %v1038, 0
        %v1269 = vsel %vm1045, %v1039, 0
        %v1272 = vsel %vm1045, %v1040, 0
        %v1275 = vsel %vm1045, %v1041, 0
        %v1278 = vsel %vm1045, %v1042, 0
        %v1281 = vsel %vm1045, %v1043, 0
        %v1284 = vsel %vm1045, %v1044, 0
        %1286 = vmatprep.subr.bf16.mxu0 0
        %1287 = vmatpush1.bf16.msra.mxu0 0
        %1288 = vmatprep.subr.bf16.mxu0 0
        %1289 = vmatpush1.bf16.msra.mxu0 0
        %1290 = vmatprep.subr.bf16.mxu0 0
        %1291 = vmatpush1.bf16.msra.mxu0 0
        %1292 = vmatprep.subr.bf16.mxu0 0
        %1293 = vmatpush1.bf16.msra.mxu0 0
        %1294 = vmatprep.subr.bf16.mxu0 0
        %1295 = vmatpush1.bf16.msra.mxu0 0
        %1296 = vmatprep.subr.bf16.mxu0 %v1254
        %1297 = vmatpush1.bf16.msra.mxu0 %v1251
        %1298 = vmatprep.subr.bf16.mxu0 %v1207
        %1299 = vmatpush1.bf16.msra.mxu0 %v1204
        %1300 = vmatprep.subr.bf16.mxu0 %v1111
        %1301 = vmatpush1.bf16.msra.mxu0 %v1108
        %1302 = vmatprep.subr.bf16.mxu0 0
        %1303 = vmatpush2.bf16.msra.mxu0 0
        %1304 = vmatprep.subr.bf16.mxu0 0
        %1305 = vmatpush2.bf16.msra.mxu0 0
        %1306 = vmatprep.subr.bf16.mxu0 0
        %1307 = vmatpush2.bf16.msra.mxu0 0
        %1308 = vmatprep.subr.bf16.mxu0 0
        %1309 = vmatpush2.bf16.msra.mxu0 0
        %1310 = vmatprep.subr.bf16.mxu0 0
        %1311 = vmatpush2.bf16.msra.mxu0 0
        %1312 = vmatprep.subr.bf16.mxu0 0
        %1313 = vmatpush2.bf16.msra.mxu0 0
        %1314 = vmatprep.subr.bf16.mxu0 0
        %1315 = vmatpush2.bf16.msra.mxu0 0
        %1316 = vmatprep.subr.bf16.mxu0 0
        %1317 = vmatpush2.bf16.msra.mxu0 0
        %1318 = vmatprep.mubr.bf16.mxu0 0
        %1319 = vmatmul.mubr.bf16.gmra.mxu0 %v1248
        %v1320 = vpop.f32.mrf.mxu0
        %v1321 = vadd.f32 %v1244, %v1320
        %v1322 = vpop.f32.mrf.mxu0
        %v1323 = vadd.f32 %v1244, %v1322
        %v1324 = vpop.f32.mrf.mxu0
        %v1325 = vpop.f32.mrf.mxu0
        %1326 = vdwg.mxu0
        %1327 = vmatprep.subr.bf16.mxu0 0
        %1328 = vmatpush1.bf16.msra.mxu0 0
        %1329 = vmatprep.subr.bf16.mxu0 0
        %1330 = vmatpush1.bf16.msra.mxu0 0
        %1331 = vmatprep.subr.bf16.mxu0 0
        %1332 = vmatpush1.bf16.msra.mxu0 0
        %1333 = vmatprep.subr.bf16.mxu0 0
        %1334 = vmatpush1.bf16.msra.mxu0 0
        %1335 = vmatprep.subr.bf16.mxu0 0
        %1336 = vmatpush1.bf16.msra.mxu0 0
        %1337 = vmatprep.subr.bf16.mxu0 %v1260
        %1338 = vmatpush1.bf16.msra.mxu0 %v1257
        %1339 = vmatprep.subr.bf16.mxu0 %v1213
        %1340 = vmatpush1.bf16.msra.mxu0 %v1210
        %1341 = vmatprep.subr.bf16.mxu0 %v1117
        %1342 = vmatpush1.bf16.msra.mxu0 %v1114
        %1343 = vmatprep.subr.bf16.mxu0 0
        %1344 = vmatpush2.bf16.msra.mxu0 0
        %1345 = vmatprep.subr.bf16.mxu0 0
        %1346 = vmatpush2.bf16.msra.mxu0 0
        %1347 = vmatprep.subr.bf16.mxu0 0
        %1348 = vmatpush2.bf16.msra.mxu0 0
        %1349 = vmatprep.subr.bf16.mxu0 0
        %1350 = vmatpush2.bf16.msra.mxu0 0
        %1351 = vmatprep.subr.bf16.mxu0 0
        %1352 = vmatpush2.bf16.msra.mxu0 0
        %1353 = vmatprep.subr.bf16.mxu0 0
        %1354 = vmatpush2.bf16.msra.mxu0 0
        %1355 = vmatprep.subr.bf16.mxu0 0
        %1356 = vmatpush2.bf16.msra.mxu0 0
        %1357 = vmatprep.subr.bf16.mxu0 0
        %1358 = vmatpush2.bf16.msra.mxu0 0
        %1359 = vmatprep.mubr.bf16.mxu0 0
        %1360 = vmatmul.mubr.bf16.gmra.mxu0 %v1248
        %v1361 = vpop.f32.mrf.mxu0
        %v1362 = vadd.f32 %v1244, %v1361
        %v1363 = vpop.f32.mrf.mxu0
        %v1364 = vadd.f32 %v1244, %v1363
        %v1365 = vpop.f32.mrf.mxu0
        %v1366 = vpop.f32.mrf.mxu0
        %1367 = vdwg.mxu0
        %1368 = vmatprep.subr.bf16.mxu0 0
        %1369 = vmatpush1.bf16.msra.mxu0 0
        %1370 = vmatprep.subr.bf16.mxu0 0
        %1371 = vmatpush1.bf16.msra.mxu0 0
        %1372 = vmatprep.subr.bf16.mxu0 0
        %1373 = vmatpush1.bf16.msra.mxu0 0
        %1374 = vmatprep.subr.bf16.mxu0 0
        %1375 = vmatpush1.bf16.msra.mxu0 0
        %1376 = vmatprep.subr.bf16.mxu0 0
        %1377 = vmatpush1.bf16.msra.mxu0 0
        %1378 = vmatprep.subr.bf16.mxu0 %v1266
        %1379 = vmatpush1.bf16.msra.mxu0 %v1263
        %1380 = vmatprep.subr.bf16.mxu0 %v1219
        %1381 = vmatpush1.bf16.msra.mxu0 %v1216
        %1382 = vmatprep.subr.bf16.mxu0 %v1123
        %1383 = vmatpush1.bf16.msra.mxu0 %v1120
        %1384 = vmatprep.subr.bf16.mxu0 0
        %1385 = vmatpush2.bf16.msra.mxu0 0
        %1386 = vmatprep.subr.bf16.mxu0 0
        %1387 = vmatpush2.bf16.msra.mxu0 0
        %1388 = vmatprep.subr.bf16.mxu0 0
        %1389 = vmatpush2.bf16.msra.mxu0 0
        %1390 = vmatprep.subr.bf16.mxu0 0
        %1391 = vmatpush2.bf16.msra.mxu0 0
        %1392 = vmatprep.subr.bf16.mxu0 0
        %1393 = vmatpush2.bf16.msra.mxu0 0
        %1394 = vmatprep.subr.bf16.mxu0 0
        %1395 = vmatpush2.bf16.msra.mxu0 0
        %1396 = vmatprep.subr.bf16.mxu0 0
        %1397 = vmatpush2.bf16.msra.mxu0 0
        %1398 = vmatprep.subr.bf16.mxu0 0
        %1399 = vmatpush2.bf16.msra.mxu0 0
        %1400 = vmatprep.mubr.bf16.mxu0 0
        %1401 = vmatmul.mubr.bf16.gmra.mxu0 %v1248
        %v1402 = vpop.f32.mrf.mxu0
        %v1403 = vadd.f32 %v1244, %v1402
        %v1404 = vpop.f32.mrf.mxu0
        %v1405 = vadd.f32 %v1244, %v1404
        %v1406 = vpop.f32.mrf.mxu0
        %v1407 = vpop.f32.mrf.mxu0
        %1408 = vdwg.mxu0
        %1409 = vmatprep.subr.bf16.mxu0 0
        %1410 = vmatpush1.bf16.msra.mxu0 0
        %1411 = vmatprep.subr.bf16.mxu0 0
        %1412 = vmatpush1.bf16.msra.mxu0 0
        %1413 = vmatprep.subr.bf16.mxu0 0
        %1414 = vmatpush1.bf16.msra.mxu0 0
        %1415 = vmatprep.subr.bf16.mxu0 0
        %1416 = vmatpush1.bf16.msra.mxu0 0
        %1417 = vmatprep.subr.bf16.mxu0 0
        %1418 = vmatpush1.bf16.msra.mxu0 0
        %1419 = vmatprep.subr.bf16.mxu0 %v1272
        %1420 = vmatpush1.bf16.msra.mxu0 %v1269
        %1421 = vmatprep.subr.bf16.mxu0 %v1225
        %1422 = vmatpush1.bf16.msra.mxu0 %v1222
        %1423 = vmatprep.subr.bf16.mxu0 %v1129
        %1424 = vmatpush1.bf16.msra.mxu0 %v1126
        %1425 = vmatprep.subr.bf16.mxu0 0
        %1426 = vmatpush2.bf16.msra.mxu0 0
        %1427 = vmatprep.subr.bf16.mxu0 0
        %1428 = vmatpush2.bf16.msra.mxu0 0
        %1429 = vmatprep.subr.bf16.mxu0 0
        %1430 = vmatpush2.bf16.msra.mxu0 0
        %1431 = vmatprep.subr.bf16.mxu0 0
        %1432 = vmatpush2.bf16.msra.mxu0 0
        %1433 = vmatprep.subr.bf16.mxu0 0
        %1434 = vmatpush2.bf16.msra.mxu0 0
        %1435 = vmatprep.subr.bf16.mxu0 0
        %1436 = vmatpush2.bf16.msra.mxu0 0
        %1437 = vmatprep.subr.bf16.mxu0 0
        %1438 = vmatpush2.bf16.msra.mxu0 0
        %1439 = vmatprep.subr.bf16.mxu0 0
        %1440 = vmatpush2.bf16.msra.mxu0 0
        %1441 = vmatprep.mubr.bf16.mxu0 0
        %1442 = vmatmul.mubr.bf16.gmra.mxu0 %v1248
        %v1443 = vpop.f32.mrf.mxu0
        %v1444 = vadd.f32 %v1244, %v1443
        %v1445 = vpop.f32.mrf.mxu0
        %v1446 = vadd.f32 %v1244, %v1445
        %v1447 = vpop.f32.mrf.mxu0
        %v1448 = vpop.f32.mrf.mxu0
        %1449 = vdwg.mxu0
        %1450 = vmatprep.subr.bf16.mxu0 0
        %1451 = vmatpush1.bf16.msra.mxu0 0
        %1452 = vmatprep.subr.bf16.mxu0 0
        %1453 = vmatpush1.bf16.msra.mxu0 0
        %1454 = vmatprep.subr.bf16.mxu0 0
        %1455 = vmatpush1.bf16.msra.mxu0 0
        %1456 = vmatprep.subr.bf16.mxu0 0
        %1457 = vmatpush1.bf16.msra.mxu0 0
        %1458 = vmatprep.subr.bf16.mxu0 0
        %1459 = vmatpush1.bf16.msra.mxu0 0
        %1460 = vmatprep.subr.bf16.mxu0 %v1278
        %1461 = vmatpush1.bf16.msra.mxu0 %v1275
        %1462 = vmatprep.subr.bf16.mxu0 %v1231
        %1463 = vmatpush1.bf16.msra.mxu0 %v1228
        %1464 = vmatprep.subr.bf16.mxu0 %v1135
        %1465 = vmatpush1.bf16.msra.mxu0 %v1132
        %1466 = vmatprep.subr.bf16.mxu0 0
        %1467 = vmatpush2.bf16.msra.mxu0 0
        %1468 = vmatprep.subr.bf16.mxu0 0
        %1469 = vmatpush2.bf16.msra.mxu0 0
        %1470 = vmatprep.subr.bf16.mxu0 0
        %1471 = vmatpush2.bf16.msra.mxu0 0
        %1472 = vmatprep.subr.bf16.mxu0 0
        %1473 = vmatpush2.bf16.msra.mxu0 0
        %1474 = vmatprep.subr.bf16.mxu0 0
        %1475 = vmatpush2.bf16.msra.mxu0 0
        %1476 = vmatprep.subr.bf16.mxu0 0
        %1477 = vmatpush2.bf16.msra.mxu0 0
        %1478 = vmatprep.subr.bf16.mxu0 0
        %1479 = vmatpush2.bf16.msra.mxu0 0
        %1480 = vmatprep.subr.bf16.mxu0 0
        %1481 = vmatpush2.bf16.msra.mxu0 0
        %1482 = vmatprep.mubr.bf16.mxu0 0
        %1483 = vmatmul.mubr.bf16.gmra.mxu0 %v1248
        %v1484 = vpop.f32.mrf.mxu0
        %v1485 = vadd.f32 %v1244, %v1484
        %v1486 = vpop.f32.mrf.mxu0
        %v1487 = vadd.f32 %v1244, %v1486
        %v1488 = vpop.f32.mrf.mxu0
        %v1489 = vpop.f32.mrf.mxu0
        %1490 = vdwg.mxu0
        %1491 = vmatprep.subr.bf16.mxu0 0
        %1492 = vmatpush1.bf16.msra.mxu0 0
        %1493 = vmatprep.subr.bf16.mxu0 0
        %1494 = vmatpush1.bf16.msra.mxu0 0
        %1495 = vmatprep.subr.bf16.mxu0 0
        %1496 = vmatpush1.bf16.msra.mxu0 0
        %1497 = vmatprep.subr.bf16.mxu0 0
        %1498 = vmatpush1.bf16.msra.mxu0 0
        %1499 = vmatprep.subr.bf16.mxu0 0
        %1500 = vmatpush1.bf16.msra.mxu0 0
        %1501 = vmatprep.subr.bf16.mxu0 %v1284
        %1502 = vmatpush1.bf16.msra.mxu0 %v1281
        %1503 = vmatprep.subr.bf16.mxu0 %v1237
        %1504 = vmatpush1.bf16.msra.mxu0 %v1234
        %1505 = vmatprep.subr.bf16.mxu0 %v1141
        %1506 = vmatpush1.bf16.msra.mxu0 %v1138
        %1507 = vmatprep.subr.bf16.mxu0 0
        %1508 = vmatpush2.bf16.msra.mxu0 0
        %1509 = vmatprep.subr.bf16.mxu0 0
        %1510 = vmatpush2.bf16.msra.mxu0 0
        %1511 = vmatprep.subr.bf16.mxu0 0
        %1512 = vmatpush2.bf16.msra.mxu0 0
        %1513 = vmatprep.subr.bf16.mxu0 0
        %1514 = vmatpush2.bf16.msra.mxu0 0
        %1515 = vmatprep.subr.bf16.mxu0 0
        %1516 = vmatpush2.bf16.msra.mxu0 0
        %1517 = vmatprep.subr.bf16.mxu0 0
        %1518 = vmatpush2.bf16.msra.mxu0 0
        %1519 = vmatprep.subr.bf16.mxu0 0
        %1520 = vmatpush2.bf16.msra.mxu0 0
        %1521 = vmatprep.subr.bf16.mxu0 0
        %1522 = vmatpush2.bf16.msra.mxu0 0
        %1523 = vmatprep.mubr.bf16.mxu0 0
        %1524 = vmatmul.mubr.bf16.gmra.mxu0 %v1248
        %v1525 = vpop.f32.mrf.mxu0
        %v1526 = vadd.f32 %v1244, %v1525
        %v1527 = vpop.f32.mrf.mxu0
        %v1528 = vadd.f32 %v1244, %v1527
        %v1529 = vpop.f32.mrf.mxu0
        %v1530 = vpop.f32.mrf.mxu0
        %1531 = vdwg.mxu0
        %vm1532 = vcmp.gt.f32.partialorder %v1321, 0.0
        %vm1533 = vcmp.gt.f32.partialorder %v1323, 0.0
        %vm1534 = vcmp.gt.f32.partialorder %v1362, 0.0
        %vm1535 = vcmp.gt.f32.partialorder %v1364, 0.0
        %vm1536 = vcmp.gt.f32.partialorder %v1403, 0.0
        %vm1537 = vcmp.gt.f32.partialorder %v1405, 0.0
        %vm1538 = vcmp.gt.f32.partialorder %v1444, 0.0
        %vm1539 = vcmp.gt.f32.partialorder %v1446, 0.0
        %vm1540 = vcmp.gt.f32.partialorder %v1485, 0.0
        %vm1541 = vcmp.gt.f32.partialorder %v1487, 0.0
        %vm1542 = vcmp.gt.f32.partialorder %v1526, 0.0
        %vm1543 = vcmp.gt.f32.partialorder %v1528, 0.0
        %v1544 = vmul.f32 %v1321, 0.01
        %v1545 = vmul.f32 %v1323, 0.01
        %v1546 = vmul.f32 %v1362, 0.01
        %v1547 = vmul.f32 %v1364, 0.01
        %v1548 = vmul.f32 %v1403, 0.01
        %v1549 = vmul.f32 %v1405, 0.01
        %v1550 = vmul.f32 %v1444, 0.01
        %v1551 = vmul.f32 %v1446, 0.01
        %v1552 = vmul.f32 %v1485, 0.01
        %v1553 = vmul.f32 %v1487, 0.01
        %v1554 = vmul.f32 %v1526, 0.01
        %v1555 = vmul.f32 %v1528, 0.01
        %v1556 = vsel %vm1532, %v1321, %v1544
        %v1557 = vsel %vm1533, %v1323, %v1545
        %v1558 = vsel %vm1534, %v1362, %v1546
        %v1559 = vsel %vm1535, %v1364, %v1547
        %v1560 = vsel %vm1536, %v1403, %v1548
        %v1561 = vsel %vm1537, %v1405, %v1549
        %v1562 = vsel %vm1538, %v1444, %v1550
        %v1563 = vsel %vm1539, %v1446, %v1551
        %v1564 = vsel %vm1540, %v1485, %v1552
        %v1565 = vsel %vm1541, %v1487, %v1553
        %v1566 = vsel %vm1542, %v1526, %v1554
        %v1567 = vsel %vm1543, %v1528, %v1555
        %v1568 = vld [vmem:[%s6] sm:$0xff]
        %v1569 = vld [vmem:[%s6 + $0x8] sm:$0xf]
        %v1572 = vlaneseq
        %v1573 = vshrl.u32 %v1572, 7
        %v1574 = vsub.s32 0, %v1573
        %v1575 = vrot.slane %v1568, %v1574
        %v1576 = vlaneseq
        %v1577 = vshrl.u32 %v1576, 7
        %v1578 = vsub.s32 1, %v1577
        %v1579 = vrot.slane %v1568, %v1578
        %v1580 = vlaneseq
        %v1581 = vshrl.u32 %v1580, 7
        %v1582 = vsub.s32 2, %v1581
        %v1583 = vrot.slane %v1568, %v1582
        %v1584 = vlaneseq
        %v1585 = vshrl.u32 %v1584, 7
        %v1586 = vsub.s32 3, %v1585
        %v1587 = vrot.slane %v1568, %v1586
        %v1588 = vlaneseq
        %v1589 = vshrl.u32 %v1588, 7
        %v1590 = vsub.s32 4, %v1589
        %v1591 = vrot.slane %v1568, %v1590
        %v1592 = vlaneseq
        %v1593 = vshrl.u32 %v1592, 7
        %v1594 = vsub.s32 5, %v1593
        %v1595 = vrot.slane %v1568, %v1594
        %v1596 = vlaneseq
        %v1597 = vshrl.u32 %v1596, 7
        %v1598 = vsub.s32 6, %v1597
        %v1599 = vrot.slane %v1568, %v1598
        %v1600 = vlaneseq
        %v1601 = vshrl.u32 %v1600, 7
        %v1602 = vsub.s32 7, %v1601
        %v1603 = vrot.slane %v1568, %v1602
        %v1604 = vlaneseq
        %v1605 = vshrl.u32 %v1604, 7
        %v1606 = vsub.s32 0, %v1605
        %v1607 = vrot.slane %v1569, %v1606
        %v1608 = vlaneseq
        %v1609 = vshrl.u32 %v1608, 7
        %v1610 = vsub.s32 1, %v1609
        %v1611 = vrot.slane %v1569, %v1610
        %v1612 = vlaneseq
        %v1613 = vshrl.u32 %v1612, 7
        %v1614 = vsub.s32 2, %v1613
        %v1615 = vrot.slane %v1569, %v1614
        %v1616 = vlaneseq
        %v1617 = vshrl.u32 %v1616, 7
        %v1618 = vsub.s32 3, %v1617
        %v1619 = vrot.slane %v1569, %v1618
        %v1632 = vmul.f32 %v1556, %v1575
        %v1633 = vmul.f32 %v1557, %v1579
        %v1634 = vmul.f32 %v1558, %v1583
        %v1635 = vmul.f32 %v1559, %v1587
        %v1636 = vmul.f32 %v1560, %v1591
        %v1637 = vmul.f32 %v1561, %v1595
        %v1638 = vmul.f32 %v1562, %v1599
        %v1639 = vmul.f32 %v1563, %v1603
        %v1640 = vmul.f32 %v1564, %v1607
        %v1641 = vmul.f32 %v1565, %v1611
        %v1642 = vmul.f32 %v1566, %v1615
        %v1643 = vmul.f32 %v1567, %v1619
        %v1644 = vsel %vm339, %v1632, 0.0
        %v1645 = vsel %vm339, %v1633, 0.0
        %v1646 = vadd.f32 %v1644, %v1645
        %v1647 = vsel %vm339, %v1634, 0.0
        %v1648 = vadd.f32 %v1646, %v1647
        %v1649 = vsel %vm339, %v1635, 0.0
        %v1650 = vadd.f32 %v1648, %v1649
        %v1651 = vsel %vm339, %v1636, 0.0
        %v1652 = vadd.f32 %v1650, %v1651
        %v1653 = vsel %vm339, %v1637, 0.0
        %v1654 = vadd.f32 %v1652, %v1653
        %v1655 = vsel %vm339, %v1638, 0.0
        %v1656 = vadd.f32 %v1654, %v1655
        %v1657 = vsel %vm339, %v1639, 0.0
        %v1658 = vadd.f32 %v1656, %v1657
        %v1659 = vsel %vm339, %v1640, 0.0
        %v1660 = vadd.f32 %v1658, %v1659
        %v1661 = vsel %vm339, %v1641, 0.0
        %v1662 = vadd.f32 %v1660, %v1661
        %v1663 = vsel %vm339, %v1642, 0.0
        %v1664 = vadd.f32 %v1662, %v1663
        %v1665 = vsel %vm339, %v1643, 0.0
        %v1666 = vadd.f32 %v1664, %v1665
        %1667 = vadd.xlane.f32.xlu0 %v1666
        %v1668 = vpop.xlane.xlu0 %1667
        %v1669 = vmul.f32 %v1668, %v529
        %v1670 = vmul.f32 %v1632, %v1556
        %v1671 = vmul.f32 %v1633, %v1557
        %v1672 = vmul.f32 %v1634, %v1558
        %v1673 = vmul.f32 %v1635, %v1559
        %v1674 = vmul.f32 %v1636, %v1560
        %v1675 = vmul.f32 %v1637, %v1561
        %v1676 = vmul.f32 %v1638, %v1562
        %v1677 = vmul.f32 %v1639, %v1563
        %v1678 = vmul.f32 %v1640, %v1564
        %v1679 = vmul.f32 %v1641, %v1565
        %v1680 = vmul.f32 %v1642, %v1566
        %v1681 = vmul.f32 %v1643, %v1567
        %v1682 = vsel %vm339, %v1670, 0.0
        %v1683 = vsel %vm339, %v1671, 0.0
        %v1684 = vadd.f32 %v1682, %v1683
        %v1685 = vsel %vm339, %v1672, 0.0
        %v1686 = vadd.f32 %v1684, %v1685
        %v1687 = vsel %vm339, %v1673, 0.0
        %v1688 = vadd.f32 %v1686, %v1687
        %v1689 = vsel %vm339, %v1674, 0.0
        %v1690 = vadd.f32 %v1688, %v1689
        %v1691 = vsel %vm339, %v1675, 0.0
        %v1692 = vadd.f32 %v1690, %v1691
        %v1693 = vsel %vm339, %v1676, 0.0
        %v1694 = vadd.f32 %v1692, %v1693
        %v1695 = vsel %vm339, %v1677, 0.0
        %v1696 = vadd.f32 %v1694, %v1695
        %v1697 = vsel %vm339, %v1678, 0.0
        %v1698 = vadd.f32 %v1696, %v1697
        %v1699 = vsel %vm339, %v1679, 0.0
        %v1700 = vadd.f32 %v1698, %v1699
        %v1701 = vsel %vm339, %v1680, 0.0
        %v1702 = vadd.f32 %v1700, %v1701
        %v1703 = vsel %vm339, %v1681, 0.0
        %v1704 = vadd.f32 %v1702, %v1703
        %1705 = vadd.xlane.f32.xlu0 %v1704
        %v1706 = vpop.xlane.xlu0 %1705
        %v1707 = vmul.f32 %v1706, %v529
        %v1708 = vmul.f32 %v1669, %v1669
        %v1709 = vsub.f32 %v1707, %v1708
        %v1710 = vmax.f32 %v1709, 0.0
        %v1711 = vadd.f32 %v1710, 1e-05
        %v1712 = vrsqrt.pop %v1711
        %v1713 = vsub.f32 %v1556, %v1669
        %v1714 = vsub.f32 %v1557, %v1669
        %v1715 = vsub.f32 %v1558, %v1669
        %v1716 = vsub.f32 %v1559, %v1669
        %v1717 = vsub.f32 %v1560, %v1669
        %v1718 = vsub.f32 %v1561, %v1669
        %v1719 = vsub.f32 %v1562, %v1669
        %v1720 = vsub.f32 %v1563, %v1669
        %v1721 = vsub.f32 %v1564, %v1669
        %v1722 = vsub.f32 %v1565, %v1669
        %v1723 = vsub.f32 %v1566, %v1669
        %v1724 = vsub.f32 %v1567, %v1669
        %v1725 = vmul.f32 %v1713, %v1712
        %v1726 = vmul.f32 %v1714, %v1712
        %v1727 = vmul.f32 %v1715, %v1712
        %v1728 = vmul.f32 %v1716, %v1712
        %v1729 = vmul.f32 %v1717, %v1712
        %v1730 = vmul.f32 %v1718, %v1712
        %v1731 = vmul.f32 %v1719, %v1712
        %v1732 = vmul.f32 %v1720, %v1712
        %v1733 = vmul.f32 %v1721, %v1712
        %v1734 = vmul.f32 %v1722, %v1712
        %v1735 = vmul.f32 %v1723, %v1712
        %v1736 = vmul.f32 %v1724, %v1712
        %v1737 = vpack.c.bf16 %v1725, %v1725
        %v1738 = vpack.c.bf16 %v1726, %v1726
        %v1739 = vpack.c.bf16 %v1727, %v1727
        %v1740 = vpack.c.bf16 %v1728, %v1728
        %v1741 = vpack.c.bf16 %v1729, %v1729
        %v1742 = vpack.c.bf16 %v1730, %v1730
        %v1743 = vpack.c.bf16 %v1731, %v1731
        %v1744 = vpack.c.bf16 %v1732, %v1732
        %v1745 = vpack.c.bf16 %v1733, %v1733
        %v1746 = vpack.c.bf16 %v1734, %v1734
        %v1747 = vpack.c.bf16 %v1735, %v1735
        %v1748 = vpack.c.bf16 %v1736, %v1736
        %v1761 = vcombine.low %v1737, %v1738
        %v1762 = vcombine.low %v1739, %v1740
        %v1764 = vunpack.c.l.s4 1983009808
        %v1765 = vunpack.c.0.s8 %v1764
        %v1766 = vlaneseq
        %v1767 = vshrl.u32 %v1766, 7
        %v1768 = vsub.s32 %v1765, %v1767
        %v1769 = vrot.slane %v1761, %v1768
        %v1771 = vunpack.c.l.s4 1983009808
        %v1772 = vunpack.c.0.s8 %v1771
        %v1773 = vlaneseq
        %v1774 = vshrl.u32 %v1773, 7
        %v1775 = vsub.s32 %v1772, %v1774
        %v1776 = vrot.slane %v1762, %v1775
        %v1777 = vcombine.low %v1769, %v1776
        %v1778 = vcombine.low %v1741, %v1742
        %v1779 = vcombine.low %v1743, %v1744
        %v1781 = vunpack.c.l.s4 1983009808
        %v1782 = vunpack.c.0.s8 %v1781
        %v1783 = vlaneseq
        %v1784 = vshrl.u32 %v1783, 7
        %v1785 = vsub.s32 %v1782, %v1784
        %v1786 = vrot.slane %v1778, %v1785
        %v1788 = vunpack.c.l.s4 1983009808
        %v1789 = vunpack.c.0.s8 %v1788
        %v1790 = vlaneseq
        %v1791 = vshrl.u32 %v1790, 7
        %v1792 = vsub.s32 %v1789, %v1791
        %v1793 = vrot.slane %v1779, %v1792
        %v1794 = vcombine.low %v1786, %v1793
        %v1795 = vcombine.low %v1745, %v1746
        %v1796 = vcombine.low %v1747, %v1748
        %v1798 = vunpack.c.l.s4 1983009808
        %v1799 = vunpack.c.0.s8 %v1798
        %v1800 = vlaneseq
        %v1801 = vshrl.u32 %v1800, 7
        %v1802 = vsub.s32 %v1799, %v1801
        %v1803 = vrot.slane %v1795, %v1802
        %v1805 = vunpack.c.l.s4 1983009808
        %v1806 = vunpack.c.0.s8 %v1805
        %v1807 = vlaneseq
        %v1808 = vshrl.u32 %v1807, 7
        %v1809 = vsub.s32 %v1806, %v1808
        %v1810 = vrot.slane %v1796, %v1809
        %v1811 = vcombine.low %v1803, %v1810
        %1815 = vst [vmem:[%s297] sm:$0xff] %v1777
        %1816 = vst [vmem:[%s297 + $0x8] sm:$0xff] %v1794
        %1817 = vst [vmem:[%s297 + $0x10] sm:$0xff] %v1811
        %s1818 = sand.u32 %s183, 1
        %s1819 = scalar_lea.sflag [#allocation5], %s1818
        %s1820 = sand.u32 %s183, 1
        %s1821 = smul.addr %s1820, 24
        %s1822 = scalar_lea.vmem [#allocation8], %s1821
        // Predicated region
        $region57: #{tpu_custom_call.1} parent=47 // pred_check
          %p1823 = pneg %p193
        $region58: #{tpu_custom_call.1} parent=47 // pred_check_branch
          %1825 = sbr.rel (%p1823) target = $region60
        $region59: #{tpu_custom_call.1} parent=47 // pred_region
          %s1827 = ssub.s32 384, 384
          %1828 = vsyncadd %s1819, %s1827
          %s1829 = smul.addr %s23, 12
          %s1830 = smul.addr %s1829, 32
          %s1831 = scalar_lea.hbm %s7, %s1830
          %s1833 = sshll.u32 %s1822, 4
          %s1834 = int_to_ptr.vmem [resolvable:$true] %s1833
          %1836 = dma.vmem_to_hbm [thread:$0]  %s1834, 384, %s1831, %s1819
        $region60: #{tpu_custom_call.1} parent=47 // pred_fallthru
          _
      $region48: #{tpu_custom_call.1} parent=5 // pred_fallthru
        _
      %p1837 = scmp.le.s32.totalorder 2, %s18
      // Predicated region
      $region61: #{tpu_custom_call.1} parent=5 // pred_check
        %p1838 = pneg %p1837
      $region62: #{tpu_custom_call.1} parent=5 // pred_check_branch
        %1840 = sbr.rel (%p1838) target = $region64
      $region63: #{tpu_custom_call.1} parent=5 // pred_region
        %s1841 = ssub.s32 %s18, 2
        // Predicated region
        $region65: #{tpu_custom_call.1} parent=63 // pred_check
          %p1842 = pneg %p199
        $region66: #{tpu_custom_call.1} parent=63 // pred_check_branch
          %1844 = sbr.rel (%p1842) target = $region68
        $region67: #{tpu_custom_call.1} parent=63 // pred_region
          %s1845 = sand.u32 %s184, 1
          %s1846 = scalar_lea.sflag [#allocation5], %s1845
          %s1847 = sand.u32 %s184, 1
          %s1848 = smul.addr %s1847, 24
          %s1849 = scalar_lea.vmem [#allocation8], %s1848
          %1850 = dma.done %s1846, 384
        $region68: #{tpu_custom_call.1} parent=63 // pred_fallthru
          _
      $region64: #{tpu_custom_call.1} parent=5 // pred_fallthru
        _
    $region6: #{tpu_custom_call.1} parent=1 // loop_footer
      %s22 = sadd.s32 1, %s18
    $region7: #{tpu_custom_call.1} parent=1 // loop_footer_branch
      %17 = sbr.rel target = $region3
    $region8: #{tpu_custom_call.1} parent=1 // loop_exit
      _
    %1851 = vsyncpa [#allocation4], 1
    %s1852 = scalar_lea.sflag [#allocation4], 1
    %1853 = vsyncpa %s1852, 1
    %1854 = vsyncpa [#allocation7], 1
    %1855 = vsyncpa [#allocation5], 1
    %s1856 = scalar_lea.sflag [#allocation5], 1
    %1857 = vsyncpa %s1856, 1

</llo_original>
